<compile_context>
chip_gen: v7x
topology: tpu7x:2x2x1
jax: 0.10.0
libtpu: 0.0.40
codegen_flags: <defaults>
</compile_context>

<pallas_src>
import math
import jax
import jax.numpy as jnp
from jax import lax
from jax.experimental import pallas as pl
from jax.experimental.pallas import tpu as pltpu


# ------------------------- in-kernel helpers -------------------------

def _layernorm(x, w, b, eps=1e-5):
    # x: (T, C) f32, w/b: (1, C) f32
    mu = jnp.mean(x, axis=-1, keepdims=True)
    var = jnp.mean((x - mu) ** 2, axis=-1, keepdims=True)
    return (x - mu) * lax.rsqrt(var + eps) * w + b


def _gelu_tanh(x):
    c = math.sqrt(2.0 / math.pi)
    return 0.5 * x * (1.0 + jnp.tanh(c * (x + 0.044715 * x * x * x)))


# ------------------------- Pallas kernel -------------------------

def make_block_kernel(n_head):
    def kernel(x_ref,
               ln1w_ref, ln1b_ref,
               wqkv_ref, bqkv_ref, wpr_ref, bpr_ref,
               ln2w_ref, ln2b_ref,
               wfc_ref, bfc_ref, wmp_ref, bmp_ref,
               o_ref):
        f32 = jnp.float32
        x = x_ref[...].astype(f32)                    # (T, C)
        T, C = x.shape
        hd = C // n_head
        mx = wqkv_ref.dtype                           # matmul operand dtype (f32 or bf16)
        scale = 1.0 / math.sqrt(hd)

        # ---- attention branch: x + c_proj(causal_attn(ln_1(x))) ----
        h = _layernorm(x, ln1w_ref[...], ln1b_ref[...])
        qkv = jnp.dot(h.astype(mx), wqkv_ref[...],
                      preferred_element_type=f32) + bqkv_ref[...]          # (T, 3C)

        q = (qkv[:, :C] * scale).astype(mx)           # fold 1/sqrt(hd) into q at (T, C)
        k = qkv[:, C:2 * C].astype(mx)
        v = qkv[:, 2 * C:].astype(mx)

        def split_heads(z):                           # (T, C) -> (H, T, hd), head-major batch
            return jnp.stack([z[:, i * hd:(i + 1) * hd] for i in range(n_head)], axis=0)

        qh, kh, vh = split_heads(q), split_heads(k), split_heads(v)

        row = lax.broadcasted_iota(jnp.int32, (1, T, T), 1)
        col = lax.broadcasted_iota(jnp.int32, (1, T, T), 2)
        causal = row >= col                           # (1, T, T)

        s = jnp.einsum('hqd,hkd->hqk', qh, kh, preferred_element_type=f32)  # (H, T, T)
        s = jnp.where(causal, s, f32(-1e30))
        s = s - jnp.max(s, axis=-1, keepdims=True)
        p = jnp.exp(s)
        p = p * pl.reciprocal(jnp.sum(p, axis=-1, keepdims=True), approx=True)

        yh = jnp.einsum('hqk,hkd->hqd', p.astype(mx), vh,
                        preferred_element_type=f32)                        # (H, T, hd)
        # fused "concat + c_proj": per-head projection slabs, accumulated over heads
        yc = jnp.einsum('hqd,hdc->hqc', yh.astype(mx), wpr_ref[...],
                        preferred_element_type=f32)                        # (H, T, C)
        x = x + jnp.sum(yc, axis=0) + bpr_ref[...]

        # ---- MLP branch: x + c_proj(gelu(c_fc(ln_2(x)))) ----
        h2 = _layernorm(x, ln2w_ref[...], ln2b_ref[...])
        h2 = jnp.dot(h2.astype(mx), wfc_ref[...],
                     preferred_element_type=f32) + bfc_ref[...]            # (T, 4C)
        h2 = _gelu_tanh(h2)
        h2 = jnp.dot(h2.astype(mx), wmp_ref[...],
                     preferred_element_type=f32) + bmp_ref[...]            # (T, C)
        x = x + h2

        o_ref[...] = x.astype(o_ref.dtype)
    return kernel


# ------------------------- wrapper -------------------------

def _prep_params(p, n_head, param_dtype):
    """Host-side: transpose Linear weights to (in, out), split c_proj per head,
    optionally cast matmul weights to bf16. LN params / biases stay f32."""
    C = p["w_qkv"].shape[1]
    hd = C // n_head
    wd = param_dtype
    f32 = jnp.float32
    return (
        p["ln1_w"].astype(f32), p["ln1_b"].astype(f32),
        p["w_qkv"].T.astype(wd),                              # (C, 3C)
        p["b_qkv"].astype(f32),                               # (1, 3C)
        p["w_proj"].T.reshape(n_head, hd, C).astype(wd),      # (H, hd, C)
        p["b_proj"].astype(f32),                              # (1, C)
        p["ln2_w"].astype(f32), p["ln2_b"].astype(f32),
        p["w_fc"].T.astype(wd),                               # (C, 4C)
        p["b_fc"].astype(f32),                                # (1, 4C)
        p["w_mproj"].T.astype(wd),                            # (4C, C)
        p["b_mproj"].astype(f32),                             # (1, C)
    )


def gpt_block(x, params, n_head, param_dtype=jnp.float32):
    B, T, C = x.shape
    weight_args = _prep_params(params, n_head, param_dtype)

    def full_spec(a):
        shp = a.shape
        return pl.BlockSpec(shp, lambda b, shp=shp: (0,) * len(shp))

    return pl.pallas_call(
        make_block_kernel(n_head),
        out_shape=jax.ShapeDtypeStruct((B, T, C), x.dtype),
        grid_spec=pltpu.PrefetchScalarGridSpec(
            num_scalar_prefetch=0,
            grid=(B,),
            in_specs=[pl.BlockSpec((None, T, C), lambda b: (b, 0, 0))]
                     + [full_spec(a) for a in weight_args],
            out_specs=pl.BlockSpec((None, T, C), lambda b: (b, 0, 0)),
        ),
        compiler_params=pltpu.CompilerParams(
            dimension_semantics=("parallel",)),
    )(x, *weight_args)


# ------------------------- pure-JAX reference -------------------------

def gpt_block_ref(x, p, n_head):
    def ln(z, w, b, eps=1e-5):
        mu = jnp.mean(z, axis=-1, keepdims=True)
        var = jnp.mean((z - mu) ** 2, axis=-1, keepdims=True)
        return (z - mu) / jnp.sqrt(var + eps) * w + b

    def lin(z, W, b):
        return z @ W.T + b

    def gelu(z):
        c = math.sqrt(2.0 / math.pi)
        return 0.5 * z * (1.0 + jnp.tanh(c * (z + 0.044715 * z ** 3)))

    B, T, C = x.shape
    hd = C // n_head
    h = ln(x, p["ln1_w"], p["ln1_b"])
    qkv = lin(h, p["w_qkv"], p["b_qkv"])
    q, k, v = jnp.split(qkv, 3, axis=-1)
    q = q.reshape(B, T, n_head, hd).transpose(0, 2, 1, 3)
    k = k.reshape(B, T, n_head, hd).transpose(0, 2, 1, 3)
    v = v.reshape(B, T, n_head, hd).transpose(0, 2, 1, 3)
    att = jnp.einsum("bhqd,bhkd->bhqk", q, k) / math.sqrt(hd)
    mask = jnp.tril(jnp.ones((T, T), dtype=bool))
    att = jnp.where(mask, att, -1e30)
    att = jax.nn.softmax(att, axis=-1)
    y = jnp.einsum("bhqk,bhkd->bhqd", att, v)
    y = y.transpose(0, 2, 1, 3).reshape(B, T, C)
    y = lin(y, p["w_proj"], p["b_proj"])
    x = x + y
    h2 = ln(x, p["ln2_w"], p["ln2_b"])
    h2 = lin(h2, p["w_fc"], p["b_fc"])
    h2 = gelu(h2)
    h2 = lin(h2, p["w_mproj"], p["b_mproj"])
    return x + h2


# ------------------------- main -------------------------

if __name__ == "__main__":
    B, T = 2, 16
    n_embd, n_head = 128, 4   # C multiple of 128 -> lane-dense output stores

    key = jax.random.PRNGKey(0)
    ks = jax.random.split(key, 10)

    def winit(k, shape, std=0.02):
        return (std * jax.random.normal(k, shape)).astype(jnp.float32)

    # Parameters in PyTorch nn.Linear convention: W is (out_features, in_features).
    params = {
        "ln1_w": jnp.ones((1, n_embd), jnp.float32),
        "ln1_b": jnp.zeros((1, n_embd), jnp.float32),
        "w_qkv": winit(ks[0], (3 * n_embd, n_embd)),
        "b_qkv": winit(ks[1], (1, 3 * n_embd)),
        "w_proj": winit(ks[2], (n_embd, n_embd)),
        "b_proj": winit(ks[3], (1, n_embd)),
        "ln2_w": jnp.ones((1, n_embd), jnp.float32),
        "ln2_b": jnp.zeros((1, n_embd), jnp.float32),
        "w_fc": winit(ks[4], (4 * n_embd, n_embd)),
        "b_fc": winit(ks[5], (1, 4 * n_embd)),
        "w_mproj": winit(ks[6], (n_embd, 4 * n_embd)),
        "b_mproj": winit(ks[7], (1, n_embd)),
    }

    x = jax.random.normal(ks[8], (B, T, n_embd), dtype=jnp.float32)

    ref = gpt_block_ref(x, params, n_head)

    # f32-weight path
    out = jax.block_until_ready(gpt_block(x, params, n_head))
    assert out.shape == (B, T, n_embd)
    err = float(jnp.max(jnp.abs(out - ref)))
    assert jnp.allclose(out, ref, rtol=1e-3, atol=1e-3), err

    # bf16-weight path (MXU-native weights; f32 accumulation / norm / softmax)
    out_bf16 = jax.block_until_ready(gpt_block(x, params, n_head, param_dtype=jnp.bfloat16))
    err_bf16 = float(jnp.max(jnp.abs(out_bf16 - ref)))
    assert jnp.allclose(out_bf16, ref, rtol=3e-2, atol=3e-2), err_bf16

    print("KERNEL_OK")
</pallas_src>

<mosaic_0001>
module attributes {stable_mosaic.version = 11 : i64} {
  func.func @kernel(%arg0: i32, %arg1: memref<1x16x128xf32, #tpu.memory_space<vmem>>, %arg2: memref<1x128xf32, #tpu.memory_space<vmem>>, %arg3: memref<1x128xf32, #tpu.memory_space<vmem>>, %arg4: memref<128x384xf32, #tpu.memory_space<vmem>>, %arg5: memref<1x384xf32, #tpu.memory_space<vmem>>, %arg6: memref<4x32x128xf32, #tpu.memory_space<vmem>>, %arg7: memref<1x128xf32, #tpu.memory_space<vmem>>, %arg8: memref<1x128xf32, #tpu.memory_space<vmem>>, %arg9: memref<1x128xf32, #tpu.memory_space<vmem>>, %arg10: memref<128x512xf32, #tpu.memory_space<vmem>>, %arg11: memref<1x512xf32, #tpu.memory_space<vmem>>, %arg12: memref<512x128xf32, #tpu.memory_space<vmem>>, %arg13: memref<1x128xf32, #tpu.memory_space<vmem>>, %arg14: memref<1x16x128xf32, #tpu.memory_space<vmem>>) attributes {dimension_semantics = [#tpu.dimension_semantics<parallel>], iteration_bounds = array<i64: 2>, scalar_prefetch = 0 : i64, scratch_operands = 0 : i64, tpu.core_type = #tpu.core_type<tc>, window_params = [{transform_indices = @transform_0, window_bounds = array<i64: 1, 16, 128>}, {pipeline_mode = #tpu.pipeline_mode<synchronous>, transform_indices = @transform_1, window_bounds = array<i64: 1, 128>}, {pipeline_mode = #tpu.pipeline_mode<synchronous>, transform_indices = @transform_2, window_bounds = array<i64: 1, 128>}, {pipeline_mode = #tpu.pipeline_mode<synchronous>, transform_indices = @transform_3, window_bounds = array<i64: 128, 384>}, {pipeline_mode = #tpu.pipeline_mode<synchronous>, transform_indices = @transform_4, window_bounds = array<i64: 1, 384>}, {pipeline_mode = #tpu.pipeline_mode<synchronous>, transform_indices = @transform_5, window_bounds = array<i64: 4, 32, 128>}, {pipeline_mode = #tpu.pipeline_mode<synchronous>, transform_indices = @transform_6, window_bounds = array<i64: 1, 128>}, {pipeline_mode = #tpu.pipeline_mode<synchronous>, transform_indices = @transform_7, window_bounds = array<i64: 1, 128>}, {pipeline_mode = #tpu.pipeline_mode<synchronous>, transform_indices = @transform_8, window_bounds = array<i64: 1, 128>}, {pipeline_mode = #tpu.pipeline_mode<synchronous>, transform_indices = @transform_9, window_bounds = array<i64: 128, 512>}, {pipeline_mode = #tpu.pipeline_mode<synchronous>, transform_indices = @transform_10, window_bounds = array<i64: 1, 512>}, {pipeline_mode = #tpu.pipeline_mode<synchronous>, transform_indices = @transform_11, window_bounds = array<i64: 512, 128>}, {pipeline_mode = #tpu.pipeline_mode<synchronous>, transform_indices = @transform_12, window_bounds = array<i64: 1, 128>}, {transform_indices = @transform_13, window_bounds = array<i64: 1, 16, 128>}]} {
    %c0 = arith.constant 0 : index
    %c0_0 = arith.constant 0 : index
    %c0_1 = arith.constant 0 : index
    %0 = vector.load %arg1[%c0, %c0_0, %c0_1] : memref<1x16x128xf32, #tpu.memory_space<vmem>>, vector<1x16x128xf32>
    %1 = vector.shape_cast %0 : vector<1x16x128xf32> to vector<16x128xf32>
    %c0_2 = arith.constant 0 : index
    %c0_3 = arith.constant 0 : index
    %2 = vector.load %arg2[%c0_2, %c0_3] : memref<1x128xf32, #tpu.memory_space<vmem>>, vector<1x128xf32>
    %c0_4 = arith.constant 0 : index
    %c0_5 = arith.constant 0 : index
    %3 = vector.load %arg3[%c0_4, %c0_5] : memref<1x128xf32, #tpu.memory_space<vmem>>, vector<1x128xf32>
    %cst = arith.constant dense<0.000000e+00> : vector<16xf32>
    %4 = vector.multi_reduction <add>, %1, %cst [1] : vector<16x128xf32> to vector<16xf32>
    %5 = vector.shape_cast %4 : vector<16xf32> to vector<16x1xf32>
    %cst_6 = arith.constant 1.280000e+02 : f32
    %6 = vector.broadcast %cst_6 : f32 to vector<16x1xf32>
    %7 = arith.divf %5, %6 : vector<16x1xf32>
    %8 = vector.broadcast %7 : vector<16x1xf32> to vector<16x128xf32>
    %9 = arith.subf %1, %8 : vector<16x128xf32>
    %10 = arith.mulf %9, %9 : vector<16x128xf32>
    %cst_7 = arith.constant dense<0.000000e+00> : vector<16xf32>
    %11 = vector.multi_reduction <add>, %10, %cst_7 [1] : vector<16x128xf32> to vector<16xf32>
    %12 = vector.shape_cast %11 : vector<16xf32> to vector<16x1xf32>
    %cst_8 = arith.constant 1.280000e+02 : f32
    %13 = vector.broadcast %cst_8 : f32 to vector<16x1xf32>
    %14 = arith.divf %12, %13 : vector<16x1xf32>
    %15 = vector.broadcast %7 : vector<16x1xf32> to vector<16x128xf32>
    %16 = arith.subf %1, %15 : vector<16x128xf32>
    %cst_9 = arith.constant 9.99999974E-6 : f32
    %17 = vector.broadcast %cst_9 : f32 to vector<16x1xf32>
    %18 = arith.addf %14, %17 : vector<16x1xf32>
    %19 = math.rsqrt %18 : vector<16x1xf32>
    %20 = vector.broadcast %19 : vector<16x1xf32> to vector<16x128xf32>
    %21 = arith.mulf %16, %20 : vector<16x128xf32>
    %22 = vector.broadcast %2 : vector<1x128xf32> to vector<16x128xf32>
    %23 = arith.mulf %21, %22 : vector<16x128xf32>
    %24 = vector.broadcast %3 : vector<1x128xf32> to vector<16x128xf32>
    %25 = arith.addf %23, %24 : vector<16x128xf32>
    %c0_10 = arith.constant 0 : index
    %c0_11 = arith.constant 0 : index
    %26 = vector.load %arg4[%c0_10, %c0_11] : memref<128x384xf32, #tpu.memory_space<vmem>>, vector<128x384xf32>
    %cst_12 = arith.constant dense<0.000000e+00> : vector<16x384xf32>
    %27 = tpu.matmul %25, %26, %cst_12 {dimension_numbers = #tpu.dot_dimension_numbers<[1], [0], [0], [1], [0, 0, 1, 1], [], []>} : vector<16x128xf32>, vector<128x384xf32>, vector<16x384xf32> -> vector<16x384xf32>
    %c0_13 = arith.constant 0 : index
    %c0_14 = arith.constant 0 : index
    %28 = vector.load %arg5[%c0_13, %c0_14] : memref<1x384xf32, #tpu.memory_space<vmem>>, vector<1x384xf32>
    %29 = vector.broadcast %28 : vector<1x384xf32> to vector<16x384xf32>
    %30 = arith.addf %27, %29 : vector<16x384xf32>
    %31 = vector.extract_strided_slice %30 {offsets = [0, 0], sizes = [16, 128], strides = [1, 1]} : vector<16x384xf32> to vector<16x128xf32>
    %cst_15 = arith.constant 0.176776692 : f32
    %32 = vector.broadcast %cst_15 : f32 to vector<16x128xf32>
    %33 = arith.mulf %31, %32 : vector<16x128xf32>
    %34 = vector.extract_strided_slice %30 {offsets = [0, 128], sizes = [16, 128], strides = [1, 1]} : vector<16x384xf32> to vector<16x128xf32>
    %35 = vector.extract_strided_slice %30 {offsets = [0, 256], sizes = [16, 128], strides = [1, 1]} : vector<16x384xf32> to vector<16x128xf32>
    %36 = vector.extract_strided_slice %33 {offsets = [0, 0], sizes = [16, 32], strides = [1, 1]} : vector<16x128xf32> to vector<16x32xf32>
    %37 = vector.extract_strided_slice %33 {offsets = [0, 32], sizes = [16, 32], strides = [1, 1]} : vector<16x128xf32> to vector<16x32xf32>
    %38 = vector.extract_strided_slice %33 {offsets = [0, 64], sizes = [16, 32], strides = [1, 1]} : vector<16x128xf32> to vector<16x32xf32>
    %39 = vector.extract_strided_slice %33 {offsets = [0, 96], sizes = [16, 32], strides = [1, 1]} : vector<16x128xf32> to vector<16x32xf32>
    %40 = vector.shape_cast %36 : vector<16x32xf32> to vector<1x16x32xf32>
    %41 = vector.shape_cast %37 : vector<16x32xf32> to vector<1x16x32xf32>
    %42 = vector.shape_cast %38 : vector<16x32xf32> to vector<1x16x32xf32>
    %43 = vector.shape_cast %39 : vector<16x32xf32> to vector<1x16x32xf32>
    %44 = tpu.concatenate %40, %41, %42, %43 in 0 : vector<1x16x32xf32>, vector<1x16x32xf32>, vector<1x16x32xf32>, vector<1x16x32xf32> -> vector<4x16x32xf32>
    %45 = vector.extract_strided_slice %34 {offsets = [0, 0], sizes = [16, 32], strides = [1, 1]} : vector<16x128xf32> to vector<16x32xf32>
    %46 = vector.extract_strided_slice %34 {offsets = [0, 32], sizes = [16, 32], strides = [1, 1]} : vector<16x128xf32> to vector<16x32xf32>
    %47 = vector.extract_strided_slice %34 {offsets = [0, 64], sizes = [16, 32], strides = [1, 1]} : vector<16x128xf32> to vector<16x32xf32>
    %48 = vector.extract_strided_slice %34 {offsets = [0, 96], sizes = [16, 32], strides = [1, 1]} : vector<16x128xf32> to vector<16x32xf32>
    %49 = vector.shape_cast %45 : vector<16x32xf32> to vector<1x16x32xf32>
    %50 = vector.shape_cast %46 : vector<16x32xf32> to vector<1x16x32xf32>
    %51 = vector.shape_cast %47 : vector<16x32xf32> to vector<1x16x32xf32>
    %52 = vector.shape_cast %48 : vector<16x32xf32> to vector<1x16x32xf32>
    %53 = tpu.concatenate %49, %50, %51, %52 in 0 : vector<1x16x32xf32>, vector<1x16x32xf32>, vector<1x16x32xf32>, vector<1x16x32xf32> -> vector<4x16x32xf32>
    %54 = vector.extract_strided_slice %35 {offsets = [0, 0], sizes = [16, 32], strides = [1, 1]} : vector<16x128xf32> to vector<16x32xf32>
    %55 = vector.extract_strided_slice %35 {offsets = [0, 32], sizes = [16, 32], strides = [1, 1]} : vector<16x128xf32> to vector<16x32xf32>
    %56 = vector.extract_strided_slice %35 {offsets = [0, 64], sizes = [16, 32], strides = [1, 1]} : vector<16x128xf32> to vector<16x32xf32>
    %57 = vector.extract_strided_slice %35 {offsets = [0, 96], sizes = [16, 32], strides = [1, 1]} : vector<16x128xf32> to vector<16x32xf32>
    %58 = vector.shape_cast %54 : vector<16x32xf32> to vector<1x16x32xf32>
    %59 = vector.shape_cast %55 : vector<16x32xf32> to vector<1x16x32xf32>
    %60 = vector.shape_cast %56 : vector<16x32xf32> to vector<1x16x32xf32>
    %61 = vector.shape_cast %57 : vector<16x32xf32> to vector<1x16x32xf32>
    %62 = tpu.concatenate %58, %59, %60, %61 in 0 : vector<1x16x32xf32>, vector<1x16x32xf32>, vector<1x16x32xf32>, vector<1x16x32xf32> -> vector<4x16x32xf32>
    %63 = tpu.iota {dimensions = array<i32: 1>} : vector<1x16x16xi32>
    %64 = tpu.iota {dimensions = array<i32: 2>} : vector<1x16x16xi32>
    %65 = arith.cmpi sge, %63, %64 : vector<1x16x16xi32>
    "tpu.trace_start"() <{level = 10 : i32, message = "hqd,hkd->hqk"}> : () -> ()
    %cst_16 = arith.constant dense<0.000000e+00> : vector<4x16x16xf32>
    %66 = tpu.matmul %44, %53, %cst_16 {dimension_numbers = #tpu.dot_dimension_numbers<[2], [2], [1], [1], [0, 0, 0, 1, 1, 1], [0], [0]>} : vector<4x16x32xf32>, vector<4x16x32xf32>, vector<4x16x16xf32> -> vector<4x16x16xf32>
    %cst_17 = arith.constant -1.000000e+30 : f32
    "tpu.trace_stop"() : () -> ()
    %67 = vector.shape_cast %65 : vector<1x16x16xi1> to vector<1x16x16xi1>
    %68 = vector.broadcast %67 : vector<1x16x16xi1> to vector<4x16x16xi1>
    %69 = vector.broadcast %cst_17 : f32 to vector<4x16x16xf32>
    %70 = arith.select %68, %66, %69 : vector<4x16x16xi1>, vector<4x16x16xf32>
    %cst_18 = arith.constant dense<0xFF800000> : vector<4x16xf32>
    %71 = vector.multi_reduction <maximumf>, %70, %cst_18 [2] : vector<4x16x16xf32> to vector<4x16xf32>
    %72 = vector.shape_cast %71 : vector<4x16xf32> to vector<4x16x1xf32>
    %73 = vector.broadcast %72 : vector<4x16x1xf32> to vector<4x16x16xf32>
    %74 = arith.subf %70, %73 : vector<4x16x16xf32>
    %75 = math.exp %74 : vector<4x16x16xf32>
    %cst_19 = arith.constant dense<0.000000e+00> : vector<4x16xf32>
    %76 = vector.multi_reduction <add>, %75, %cst_19 [2] : vector<4x16x16xf32> to vector<4x16xf32>
    %77 = vector.shape_cast %76 : vector<4x16xf32> to vector<4x16x1xf32>
    %78 = tpu.reciprocal %77 {approx = true} : vector<4x16x1xf32> -> vector<4x16x1xf32>
    %79 = vector.broadcast %78 : vector<4x16x1xf32> to vector<4x16x16xf32>
    %80 = arith.mulf %75, %79 : vector<4x16x16xf32>
    "tpu.trace_start"() <{level = 10 : i32, message = "hqk,hkd->hqd"}> : () -> ()
    %cst_20 = arith.constant dense<0.000000e+00> : vector<4x16x32xf32>
    %81 = tpu.matmul %80, %62, %cst_20 {dimension_numbers = #tpu.dot_dimension_numbers<[2], [1], [1], [2], [0, 0, 0, 1, 1, 2], [0], [0]>} : vector<4x16x16xf32>, vector<4x16x32xf32>, vector<4x16x32xf32> -> vector<4x16x32xf32>
    "tpu.trace_stop"() : () -> ()
    %c0_21 = arith.constant 0 : index
    %c0_22 = arith.constant 0 : index
    %c0_23 = arith.constant 0 : index
    %82 = vector.load %arg6[%c0_21, %c0_22, %c0_23] : memref<4x32x128xf32, #tpu.memory_space<vmem>>, vector<4x32x128xf32>
    "tpu.trace_start"() <{level = 10 : i32, message = "hqd,hdc->hqc"}> : () -> ()
    %cst_24 = arith.constant dense<0.000000e+00> : vector<4x16x128xf32>
    %83 = tpu.matmul %81, %82, %cst_24 {dimension_numbers = #tpu.dot_dimension_numbers<[2], [1], [1], [2], [0, 0, 0, 1, 1, 2], [0], [0]>} : vector<4x16x32xf32>, vector<4x32x128xf32>, vector<4x16x128xf32> -> vector<4x16x128xf32>
    "tpu.trace_stop"() : () -> ()
    %cst_25 = arith.constant dense<0.000000e+00> : vector<16x128xf32>
    %84 = vector.multi_reduction <add>, %83, %cst_25 [0] : vector<4x16x128xf32> to vector<16x128xf32>
    %85 = arith.addf %1, %84 : vector<16x128xf32>
    %c0_26 = arith.constant 0 : index
    %c0_27 = arith.constant 0 : index
    %86 = vector.load %arg7[%c0_26, %c0_27] : memref<1x128xf32, #tpu.memory_space<vmem>>, vector<1x128xf32>
    %87 = vector.broadcast %86 : vector<1x128xf32> to vector<16x128xf32>
    %88 = arith.addf %85, %87 : vector<16x128xf32>
    %c0_28 = arith.constant 0 : index
    %c0_29 = arith.constant 0 : index
    %89 = vector.load %arg8[%c0_28, %c0_29] : memref<1x128xf32, #tpu.memory_space<vmem>>, vector<1x128xf32>
    %c0_30 = arith.constant 0 : index
    %c0_31 = arith.constant 0 : index
    %90 = vector.load %arg9[%c0_30, %c0_31] : memref<1x128xf32, #tpu.memory_space<vmem>>, vector<1x128xf32>
    %cst_32 = arith.constant dense<0.000000e+00> : vector<16xf32>
    %91 = vector.multi_reduction <add>, %88, %cst_32 [1] : vector<16x128xf32> to vector<16xf32>
    %92 = vector.shape_cast %91 : vector<16xf32> to vector<16x1xf32>
    %cst_33 = arith.constant 1.280000e+02 : f32
    %93 = vector.broadcast %cst_33 : f32 to vector<16x1xf32>
    %94 = arith.divf %92, %93 : vector<16x1xf32>
    %95 = vector.broadcast %94 : vector<16x1xf32> to vector<16x128xf32>
    %96 = arith.subf %88, %95 : vector<16x128xf32>
    %97 = arith.mulf %96, %96 : vector<16x128xf32>
    %cst_34 = arith.constant dense<0.000000e+00> : vector<16xf32>
    %98 = vector.multi_reduction <add>, %97, %cst_34 [1] : vector<16x128xf32> to vector<16xf32>
    %99 = vector.shape_cast %98 : vector<16xf32> to vector<16x1xf32>
    %cst_35 = arith.constant 1.280000e+02 : f32
    %100 = vector.broadcast %cst_35 : f32 to vector<16x1xf32>
    %101 = arith.divf %99, %100 : vector<16x1xf32>
    %102 = vector.broadcast %94 : vector<16x1xf32> to vector<16x128xf32>
    %103 = arith.subf %88, %102 : vector<16x128xf32>
    %cst_36 = arith.constant 9.99999974E-6 : f32
    %104 = vector.broadcast %cst_36 : f32 to vector<16x1xf32>
    %105 = arith.addf %101, %104 : vector<16x1xf32>
    %106 = math.rsqrt %105 : vector<16x1xf32>
    %107 = vector.broadcast %106 : vector<16x1xf32> to vector<16x128xf32>
    %108 = arith.mulf %103, %107 : vector<16x128xf32>
    %109 = vector.broadcast %89 : vector<1x128xf32> to vector<16x128xf32>
    %110 = arith.mulf %108, %109 : vector<16x128xf32>
    %111 = vector.broadcast %90 : vector<1x128xf32> to vector<16x128xf32>
    %112 = arith.addf %110, %111 : vector<16x128xf32>
    %c0_37 = arith.constant 0 : index
    %c0_38 = arith.constant 0 : index
    %113 = vector.load %arg10[%c0_37, %c0_38] : memref<128x512xf32, #tpu.memory_space<vmem>>, vector<128x512xf32>
    %cst_39 = arith.constant dense<0.000000e+00> : vector<16x512xf32>
    %114 = tpu.matmul %112, %113, %cst_39 {dimension_numbers = #tpu.dot_dimension_numbers<[1], [0], [0], [1], [0, 0, 1, 1], [], []>} : vector<16x128xf32>, vector<128x512xf32>, vector<16x512xf32> -> vector<16x512xf32>
    %c0_40 = arith.constant 0 : index
    %c0_41 = arith.constant 0 : index
    %115 = vector.load %arg11[%c0_40, %c0_41] : memref<1x512xf32, #tpu.memory_space<vmem>>, vector<1x512xf32>
    %116 = vector.broadcast %115 : vector<1x512xf32> to vector<16x512xf32>
    %117 = arith.addf %114, %116 : vector<16x512xf32>
    %cst_42 = arith.constant 5.000000e-01 : f32
    %118 = vector.broadcast %cst_42 : f32 to vector<16x512xf32>
    %119 = arith.mulf %118, %117 : vector<16x512xf32>
    %cst_43 = arith.constant 4.471500e-02 : f32
    %120 = vector.broadcast %cst_43 : f32 to vector<16x512xf32>
    %121 = arith.mulf %120, %117 : vector<16x512xf32>
    %122 = arith.mulf %121, %117 : vector<16x512xf32>
    %123 = arith.mulf %122, %117 : vector<16x512xf32>
    %124 = arith.addf %117, %123 : vector<16x512xf32>
    %cst_44 = arith.constant 0.797884583 : f32
    %125 = vector.broadcast %cst_44 : f32 to vector<16x512xf32>
    %126 = arith.mulf %125, %124 : vector<16x512xf32>
    %127 = math.tanh %126 : vector<16x512xf32>
    %cst_45 = arith.constant 1.000000e+00 : f32
    %128 = vector.broadcast %cst_45 : f32 to vector<16x512xf32>
    %129 = arith.addf %128, %127 : vector<16x512xf32>
    %130 = arith.mulf %119, %129 : vector<16x512xf32>
    %c0_46 = arith.constant 0 : index
    %c0_47 = arith.constant 0 : index
    %131 = vector.load %arg12[%c0_46, %c0_47] : memref<512x128xf32, #tpu.memory_space<vmem>>, vector<512x128xf32>
    %cst_48 = arith.constant dense<0.000000e+00> : vector<16x128xf32>
    %132 = tpu.matmul %130, %131, %cst_48 {dimension_numbers = #tpu.dot_dimension_numbers<[1], [0], [0], [1], [0, 0, 1, 1], [], []>} : vector<16x512xf32>, vector<512x128xf32>, vector<16x128xf32> -> vector<16x128xf32>
    %c0_49 = arith.constant 0 : index
    %c0_50 = arith.constant 0 : index
    %133 = vector.load %arg13[%c0_49, %c0_50] : memref<1x128xf32, #tpu.memory_space<vmem>>, vector<1x128xf32>
    %134 = vector.broadcast %133 : vector<1x128xf32> to vector<16x128xf32>
    %135 = arith.addf %132, %134 : vector<16x128xf32>
    %136 = arith.addf %88, %135 : vector<16x128xf32>
    %c0_51 = arith.constant 0 : index
    %c0_52 = arith.constant 0 : index
    %c0_53 = arith.constant 0 : index
    %137 = vector.load %arg14[%c0_51, %c0_52, %c0_53] : memref<1x16x128xf32, #tpu.memory_space<vmem>>, vector<1x16x128xf32>
    %138 = vector.shape_cast %137 : vector<1x16x128xf32> to vector<16x128xf32>
    %139 = vector.shape_cast %136 : vector<16x128xf32> to vector<1x16x128xf32>
    tpu.vector_store %arg14[%c0_51, %c0_52, %c0_53], %139 {strides = array<i32>} : memref<1x16x128xf32, #tpu.memory_space<vmem>>, vector<1x16x128xf32>,
    return
  }
  func.func @transform_0(%arg0: i32) -> (i32, i32, i32) {
    %c0_i32 = arith.constant 0 : i32
    %c0_i32_0 = arith.constant 0 : i32
    %c0_i32_1 = arith.constant 0 : i32
    return %arg0, %c0_i32, %c0_i32_0 : i32, i32, i32
  }
  func.func @transform_1(%arg0: i32) -> (i32, i32) {
    %c0_i32 = arith.constant 0 : i32
    %c0_i32_0 = arith.constant 0 : i32
    %c0_i32_1 = arith.constant 0 : i32
    return %c0_i32, %c0_i32_0 : i32, i32
  }
  func.func @transform_2(%arg0: i32) -> (i32, i32) {
    %c0_i32 = arith.constant 0 : i32
    %c0_i32_0 = arith.constant 0 : i32
    %c0_i32_1 = arith.constant 0 : i32
    return %c0_i32, %c0_i32_0 : i32, i32
  }
  func.func @transform_3(%arg0: i32) -> (i32, i32) {
    %c0_i32 = arith.constant 0 : i32
    %c0_i32_0 = arith.constant 0 : i32
    %c0_i32_1 = arith.constant 0 : i32
    return %c0_i32, %c0_i32_0 : i32, i32
  }
  func.func @transform_4(%arg0: i32) -> (i32, i32) {
    %c0_i32 = arith.constant 0 : i32
    %c0_i32_0 = arith.constant 0 : i32
    %c0_i32_1 = arith.constant 0 : i32
    return %c0_i32, %c0_i32_0 : i32, i32
  }
  func.func @transform_5(%arg0: i32) -> (i32, i32, i32) {
    %c0_i32 = arith.constant 0 : i32
    %c0_i32_0 = arith.constant 0 : i32
    %c0_i32_1 = arith.constant 0 : i32
    %c0_i32_2 = arith.constant 0 : i32
    return %c0_i32, %c0_i32_0, %c0_i32_1 : i32, i32, i32
  }
  func.func @transform_6(%arg0: i32) -> (i32, i32) {
    %c0_i32 = arith.constant 0 : i32
    %c0_i32_0 = arith.constant 0 : i32
    %c0_i32_1 = arith.constant 0 : i32
    return %c0_i32, %c0_i32_0 : i32, i32
  }
  func.func @transform_7(%arg0: i32) -> (i32, i32) {
    %c0_i32 = arith.constant 0 : i32
    %c0_i32_0 = arith.constant 0 : i32
    %c0_i32_1 = arith.constant 0 : i32
    return %c0_i32, %c0_i32_0 : i32, i32
  }
  func.func @transform_8(%arg0: i32) -> (i32, i32) {
    %c0_i32 = arith.constant 0 : i32
    %c0_i32_0 = arith.constant 0 : i32
    %c0_i32_1 = arith.constant 0 : i32
    return %c0_i32, %c0_i32_0 : i32, i32
  }
  func.func @transform_9(%arg0: i32) -> (i32, i32) {
    %c0_i32 = arith.constant 0 : i32
    %c0_i32_0 = arith.constant 0 : i32
    %c0_i32_1 = arith.constant 0 : i32
    return %c0_i32, %c0_i32_0 : i32, i32
  }
  func.func @transform_10(%arg0: i32) -> (i32, i32) {
    %c0_i32 = arith.constant 0 : i32
    %c0_i32_0 = arith.constant 0 : i32
    %c0_i32_1 = arith.constant 0 : i32
    return %c0_i32, %c0_i32_0 : i32, i32
  }
  func.func @transform_11(%arg0: i32) -> (i32, i32) {
    %c0_i32 = arith.constant 0 : i32
    %c0_i32_0 = arith.constant 0 : i32
    %c0_i32_1 = arith.constant 0 : i32
    return %c0_i32, %c0_i32_0 : i32, i32
  }
  func.func @transform_12(%arg0: i32) -> (i32, i32) {
    %c0_i32 = arith.constant 0 : i32
    %c0_i32_0 = arith.constant 0 : i32
    %c0_i32_1 = arith.constant 0 : i32
    return %c0_i32, %c0_i32_0 : i32, i32
  }
  func.func @transform_13(%arg0: i32) -> (i32, i32, i32) {
    %c0_i32 = arith.constant 0 : i32
    %c0_i32_0 = arith.constant 0 : i32
    %c0_i32_1 = arith.constant 0 : i32
    return %arg0, %c0_i32, %c0_i32_0 : i32, i32, i32
  }
}

</mosaic_0001>

<llo_original>
// kernel: tpu_custom_call.1
$region0: #{tpu_custom_call.1}
  #allocation0 [shape = 'u32[]', space=smem, size = 0x4, offset = 0x4, fixed_abs, tag = 'smem constant byte address 0x4 - core index']
  #allocation1 [shape = 'u32[144,128]{1,0:T(1,128)}', space=vmem, size = 0x12000, scoped, tag = 'internal scratch']
  %s0 = inlined_call_operand.hbm [shape: f32[2,16,128], index: 0, kind: input, shape index: {}]
  %s1 = inlined_call_operand.hbm [shape: f32[1,128], index: 1, kind: input, shape index: {}]
  %s2 = inlined_call_operand.hbm [shape: f32[1,128], index: 2, kind: input, shape index: {}]
  %s3 = inlined_call_operand.hbm [shape: f32[128,384], index: 3, kind: input, shape index: {}]
  %s4 = inlined_call_operand.vmem [shape: f32[1,384], index: 4, kind: input, shape index: {}]
  %s5 = inlined_call_operand.hbm [shape: f32[4,32,128], index: 5, kind: input, shape index: {}]
  %s6 = inlined_call_operand.vmem [shape: f32[1,128], index: 6, kind: input, shape index: {}]
  %s7 = inlined_call_operand.vmem [shape: f32[1,128], index: 7, kind: input, shape index: {}]
  %s8 = inlined_call_operand.vmem [shape: f32[1,128], index: 8, kind: input, shape index: {}]
  %s9 = inlined_call_operand.hbm [shape: f32[128,512], index: 9, kind: input, shape index: {}]
  %s10 = inlined_call_operand.vmem [shape: f32[1,512], index: 10, kind: input, shape index: {}]
  %s11 = inlined_call_operand.hbm [shape: f32[512,128], index: 11, kind: input, shape index: {}]
  %s12 = inlined_call_operand.vmem [shape: f32[1,128], index: 12, kind: input, shape index: {}]
  %s13 = inlined_call_operand.hbm [shape: f32[2,16,128], index: 13, kind: output, shape index: {}]
  %s14 = sld [smem:[#allocation0]]
  $region113: #{tpu_custom_call.1} parent=0
    _
  %s16 = ssub.s32 1, %s14
  %s17 = scalar_select 0, %s16, %s14
  $region1: #{tpu_custom_call.1} parent=0
    #allocation2 [shape = 'u8[16384]{0}', space=vmem, size = 0x4000, scoped, tag = 'input window, operand 0']
    #allocation3 [shape = 's32[2]{0}', space=sflag, size = 0x8, scoped, tag = 'scoped memory for tpu_custom_call.1']
    #allocation4 [shape = 's32[2]{0}', space=sflag, size = 0x8, scoped, tag = 'scoped memory for tpu_custom_call.1']
    #allocation5 [shape = 'u8[512]{0}', space=vmem, size = 0x400, scoped, tag = 'input window, operand 1, single buffered']
    #allocation6 [shape = 's32[1]{0}', space=sflag, size = 0x4, scoped, tag = 'scoped memory for tpu_custom_call.1']
    #allocation7 [shape = 'u8[512]{0}', space=vmem, size = 0x400, scoped, tag = 'input window, operand 2, single buffered']
    #allocation8 [shape = 'u8[196608]{0}', space=vmem, size = 0x30000, scoped, tag = 'input window, operand 3, single buffered']
    #allocation9 [shape = 's32[1]{0}', space=sflag, size = 0x4, scoped, tag = 'scoped memory for tpu_custom_call.1']
    #allocation10 [shape = 'u8[65536]{0}', space=vmem, size = 0x10000, scoped, tag = 'input window, operand 5, single buffered']
    #allocation11 [shape = 'u8[262144]{0}', space=vmem, size = 0x40000, scoped, tag = 'input window, operand 9, single buffered']
    #allocation12 [shape = 's32[1]{0}', space=sflag, size = 0x4, scoped, tag = 'scoped memory for tpu_custom_call.1']
    #allocation13 [shape = 'u8[262144]{0}', space=vmem, size = 0x40000, scoped, tag = 'input window, operand 11, single buffered']
    #allocation14 [shape = 'u8[16384]{0}', space=vmem, size = 0x4000, scoped, tag = 'output window, operand 0']
    %18 = vsyncpa [#allocation3], 0
    %s19 = scalar_lea.sflag [#allocation3], 1
    %20 = vsyncpa %s19, 0
    %21 = vsyncpa [#allocation6], 0
    %22 = vsyncpa [#allocation9], 0
    %23 = vsyncpa [#allocation12], 0
    %24 = vsyncpa [#allocation4], 0
    %s25 = scalar_lea.sflag [#allocation4], 1
    %26 = vsyncpa %s25, 0
    loop: start=0, step=1, limit=4
    $region2: #{tpu_custom_call.1} parent=1 // loop_pre_header
      _
    $region3: #{tpu_custom_call.1} parent=1 // loop_header
      %s28 = sphi 0, %s32
      %p29 = scmp.ge.s32.totalorder %s28, 4
      %s38 = sphi 0, %s40
      %s41 = sphi 0, %s38
      %s42 = sphi 0, %s41
      %s58 = sphi 0, %s42
      %s62 = sphi 0, %s62
      %s64 = sphi 0, %s62
      %s65 = sphi 0, %s64
      %s79 = sphi 0, %s65
      %s83 = sphi 0, %s83
      %s85 = sphi 0, %s83
      %s86 = sphi 0, %s85
      %s100 = sphi 0, %s86
      %s104 = sphi 0, %s104
      %s106 = sphi 0, %s104
      %s107 = sphi 0, %s106
      %s121 = sphi 0, %s107
      %s125 = sphi 0, %s125
      %s127 = sphi 0, %s125
      %s128 = sphi 0, %s127
      %s142 = sphi 0, %s128
      %s146 = sphi 0, %s146
      %s148 = sphi 0, %s146
      %s149 = sphi 0, %s148
      %s163 = sphi 0, %s149
      %s167 = sphi 0, %s167
      %s169 = sphi 0, %s167
      %s170 = sphi 0, %s169
      %s184 = sphi 0, %s170
      %s188 = sphi 0, %s188
      %s190 = sphi 0, %s188
      %s191 = sphi 0, %s190
      %s205 = sphi 0, %s191
      %s209 = sphi 0, %s209
      %s211 = sphi 0, %s209
      %s212 = sphi 0, %s211
      %s226 = sphi 0, %s212
      %s230 = sphi 0, %s230
      %s232 = sphi 0, %s230
      %s233 = sphi 0, %s232
      %s247 = sphi 0, %s233
      %s251 = sphi 0, %s251
      %s253 = sphi 0, %s251
      %s254 = sphi 0, %s253
      %s268 = sphi 0, %s254
      %s272 = sphi 0, %s272
      %s274 = sphi 0, %s272
      %s275 = sphi 0, %s274
      %s289 = sphi 0, %s275
      %s293 = sphi 0, %s293
      %s295 = sphi 0, %s293
      %s296 = sphi 0, %s295
      %s310 = sphi 0, %s296
      %s316 = sphi 0, %s318
      %s319 = sphi 0, %s316
      %s320 = sphi 0, %s319
      %s336 = sphi 0, %s320
    $region4: #{tpu_custom_call.1} parent=1 // loop_header_branch
      %31 = sbr.rel (%p29) target = $region8
    $region5: #{tpu_custom_call.1} parent=1 // loop_body
      %s33 = ssub.s32 %s28, 1
      %s34 = ssub.s32 %s28, 2
      %s35 = sadd.s32 %s28, 1
      %s36 = ssub.s32 %s28, %s35
      %p37 = scmp.eq.s32.totalorder %s36, 0
      %s39 = sadd.s32 %s38, 1
      %s40 = scalar_select %p37, %s38, %s39
      %p43 = pneg %p37
      %p44 = scmp.eq.s32.totalorder %s28, 1
      %p45 = por %p43, %p44
      %p46 = scmp.ne.s32.totalorder %s38, %s41
      %p47 = scmp.eq.s32.totalorder %s28, 0
      %p48 = por %p46, %p47
      %p49 = scmp.ne.s32.totalorder %s38, %s41
      %p50 = scmp.eq.s32.totalorder %s33, 1
      %p51 = por %p49, %p50
      %p52 = scmp.ne.s32.totalorder %s41, %s42
      %p53 = scmp.eq.s32.totalorder %s33, 0
      %p54 = por %p52, %p53
      %p55 = scmp.ne.s32.totalorder %s41, %s42
      %p56 = scmp.eq.s32.totalorder %s34, 1
      %p57 = por %p55, %p56
      %p59 = scmp.ne.s32.totalorder %s42, %s58
      %p60 = scmp.eq.s32.totalorder %s34, 0
      %p61 = por %p59, %p60
      %s63 = sadd.s32 %s62, 1
      %p66 = scmp.eq.s32.totalorder %s28, 1
      %p67 = scmp.ne.s32.totalorder %s62, %s64
      %p68 = scmp.eq.s32.totalorder %s28, 0
      %p69 = por %p67, %p68
      %p70 = scmp.ne.s32.totalorder %s62, %s64
      %p71 = scmp.eq.s32.totalorder %s33, 1
      %p72 = por %p70, %p71
      %p73 = scmp.ne.s32.totalorder %s64, %s65
      %p74 = scmp.eq.s32.totalorder %s33, 0
      %p75 = por %p73, %p74
      %p76 = scmp.ne.s32.totalorder %s64, %s65
      %p77 = scmp.eq.s32.totalorder %s34, 1
      %p78 = por %p76, %p77
      %p80 = scmp.ne.s32.totalorder %s65, %s79
      %p81 = scmp.eq.s32.totalorder %s34, 0
      %p82 = por %p80, %p81
      %s84 = sadd.s32 %s83, 1
      %p87 = scmp.eq.s32.totalorder %s28, 1
      %p88 = scmp.ne.s32.totalorder %s83, %s85
      %p89 = scmp.eq.s32.totalorder %s28, 0
      %p90 = por %p88, %p89
      %p91 = scmp.ne.s32.totalorder %s83, %s85
      %p92 = scmp.eq.s32.totalorder %s33, 1
      %p93 = por %p91, %p92
      %p94 = scmp.ne.s32.totalorder %s85, %s86
      %p95 = scmp.eq.s32.totalorder %s33, 0
      %p96 = por %p94, %p95
      %p97 = scmp.ne.s32.totalorder %s85, %s86
      %p98 = scmp.eq.s32.totalorder %s34, 1
      %p99 = por %p97, %p98
      %p101 = scmp.ne.s32.totalorder %s86, %s100
      %p102 = scmp.eq.s32.totalorder %s34, 0
      %p103 = por %p101, %p102
      %s105 = sadd.s32 %s104, 1
      %p108 = scmp.eq.s32.totalorder %s28, 1
      %p109 = scmp.ne.s32.totalorder %s104, %s106
      %p110 = scmp.eq.s32.totalorder %s28, 0
      %p111 = por %p109, %p110
      %p112 = scmp.ne.s32.totalorder %s104, %s106
      %p113 = scmp.eq.s32.totalorder %s33, 1
      %p114 = por %p112, %p113
      %p115 = scmp.ne.s32.totalorder %s106, %s107
      %p116 = scmp.eq.s32.totalorder %s33, 0
      %p117 = por %p115, %p116
      %p118 = scmp.ne.s32.totalorder %s106, %s107
      %p119 = scmp.eq.s32.totalorder %s34, 1
      %p120 = por %p118, %p119
      %p122 = scmp.ne.s32.totalorder %s107, %s121
      %p123 = scmp.eq.s32.totalorder %s34, 0
      %p124 = por %p122, %p123
      %s126 = sadd.s32 %s125, 1
      %p129 = scmp.eq.s32.totalorder %s28, 1
      %p130 = scmp.ne.s32.totalorder %s125, %s127
      %p131 = scmp.eq.s32.totalorder %s28, 0
      %p132 = por %p130, %p131
      %p133 = scmp.ne.s32.totalorder %s125, %s127
      %p134 = scmp.eq.s32.totalorder %s33, 1
      %p135 = por %p133, %p134
      %p136 = scmp.ne.s32.totalorder %s127, %s128
      %p137 = scmp.eq.s32.totalorder %s33, 0
      %p138 = por %p136, %p137
      %p139 = scmp.ne.s32.totalorder %s127, %s128
      %p140 = scmp.eq.s32.totalorder %s34, 1
      %p141 = por %p139, %p140
      %p143 = scmp.ne.s32.totalorder %s128, %s142
      %p144 = scmp.eq.s32.totalorder %s34, 0
      %p145 = por %p143, %p144
      %s147 = sadd.s32 %s146, 1
      %p150 = scmp.eq.s32.totalorder %s28, 1
      %p151 = scmp.ne.s32.totalorder %s146, %s148
      %p152 = scmp.eq.s32.totalorder %s28, 0
      %p153 = por %p151, %p152
      %p154 = scmp.ne.s32.totalorder %s146, %s148
      %p155 = scmp.eq.s32.totalorder %s33, 1
      %p156 = por %p154, %p155
      %p157 = scmp.ne.s32.totalorder %s148, %s149
      %p158 = scmp.eq.s32.totalorder %s33, 0
      %p159 = por %p157, %p158
      %p160 = scmp.ne.s32.totalorder %s148, %s149
      %p161 = scmp.eq.s32.totalorder %s34, 1
      %p162 = por %p160, %p161
      %p164 = scmp.ne.s32.totalorder %s149, %s163
      %p165 = scmp.eq.s32.totalorder %s34, 0
      %p166 = por %p164, %p165
      %s168 = sadd.s32 %s167, 1
      %p171 = scmp.eq.s32.totalorder %s28, 1
      %p172 = scmp.ne.s32.totalorder %s167, %s169
      %p173 = scmp.eq.s32.totalorder %s28, 0
      %p174 = por %p172, %p173
      %p175 = scmp.ne.s32.totalorder %s167, %s169
      %p176 = scmp.eq.s32.totalorder %s33, 1
      %p177 = por %p175, %p176
      %p178 = scmp.ne.s32.totalorder %s169, %s170
      %p179 = scmp.eq.s32.totalorder %s33, 0
      %p180 = por %p178, %p179
      %p181 = scmp.ne.s32.totalorder %s169, %s170
      %p182 = scmp.eq.s32.totalorder %s34, 1
      %p183 = por %p181, %p182
      %p185 = scmp.ne.s32.totalorder %s170, %s184
      %p186 = scmp.eq.s32.totalorder %s34, 0
      %p187 = por %p185, %p186
      %s189 = sadd.s32 %s188, 1
      %p192 = scmp.eq.s32.totalorder %s28, 1
      %p193 = scmp.ne.s32.totalorder %s188, %s190
      %p194 = scmp.eq.s32.totalorder %s28, 0
      %p195 = por %p193, %p194
      %p196 = scmp.ne.s32.totalorder %s188, %s190
      %p197 = scmp.eq.s32.totalorder %s33, 1
      %p198 = por %p196, %p197
      %p199 = scmp.ne.s32.totalorder %s190, %s191
      %p200 = scmp.eq.s32.totalorder %s33, 0
      %p201 = por %p199, %p200
      %p202 = scmp.ne.s32.totalorder %s190, %s191
      %p203 = scmp.eq.s32.totalorder %s34, 1
      %p204 = por %p202, %p203
      %p206 = scmp.ne.s32.totalorder %s191, %s205
      %p207 = scmp.eq.s32.totalorder %s34, 0
      %p208 = por %p206, %p207
      %s210 = sadd.s32 %s209, 1
      %p213 = scmp.eq.s32.totalorder %s28, 1
      %p214 = scmp.ne.s32.totalorder %s209, %s211
      %p215 = scmp.eq.s32.totalorder %s28, 0
      %p216 = por %p214, %p215
      %p217 = scmp.ne.s32.totalorder %s209, %s211
      %p218 = scmp.eq.s32.totalorder %s33, 1
      %p219 = por %p217, %p218
      %p220 = scmp.ne.s32.totalorder %s211, %s212
      %p221 = scmp.eq.s32.totalorder %s33, 0
      %p222 = por %p220, %p221
      %p223 = scmp.ne.s32.totalorder %s211, %s212
      %p224 = scmp.eq.s32.totalorder %s34, 1
      %p225 = por %p223, %p224
      %p227 = scmp.ne.s32.totalorder %s212, %s226
      %p228 = scmp.eq.s32.totalorder %s34, 0
      %p229 = por %p227, %p228
      %s231 = sadd.s32 %s230, 1
      %p234 = scmp.eq.s32.totalorder %s28, 1
      %p235 = scmp.ne.s32.totalorder %s230, %s232
      %p236 = scmp.eq.s32.totalorder %s28, 0
      %p237 = por %p235, %p236
      %p238 = scmp.ne.s32.totalorder %s230, %s232
      %p239 = scmp.eq.s32.totalorder %s33, 1
      %p240 = por %p238, %p239
      %p241 = scmp.ne.s32.totalorder %s232, %s233
      %p242 = scmp.eq.s32.totalorder %s33, 0
      %p243 = por %p241, %p242
      %p244 = scmp.ne.s32.totalorder %s232, %s233
      %p245 = scmp.eq.s32.totalorder %s34, 1
      %p246 = por %p244, %p245
      %p248 = scmp.ne.s32.totalorder %s233, %s247
      %p249 = scmp.eq.s32.totalorder %s34, 0
      %p250 = por %p248, %p249
      %s252 = sadd.s32 %s251, 1
      %p255 = scmp.eq.s32.totalorder %s28, 1
      %p256 = scmp.ne.s32.totalorder %s251, %s253
      %p257 = scmp.eq.s32.totalorder %s28, 0
      %p258 = por %p256, %p257
      %p259 = scmp.ne.s32.totalorder %s251, %s253
      %p260 = scmp.eq.s32.totalorder %s33, 1
      %p261 = por %p259, %p260
      %p262 = scmp.ne.s32.totalorder %s253, %s254
      %p263 = scmp.eq.s32.totalorder %s33, 0
      %p264 = por %p262, %p263
      %p265 = scmp.ne.s32.totalorder %s253, %s254
      %p266 = scmp.eq.s32.totalorder %s34, 1
      %p267 = por %p265, %p266
      %p269 = scmp.ne.s32.totalorder %s254, %s268
      %p270 = scmp.eq.s32.totalorder %s34, 0
      %p271 = por %p269, %p270
      %s273 = sadd.s32 %s272, 1
      %p276 = scmp.eq.s32.totalorder %s28, 1
      %p277 = scmp.ne.s32.totalorder %s272, %s274
      %p278 = scmp.eq.s32.totalorder %s28, 0
      %p279 = por %p277, %p278
      %p280 = scmp.ne.s32.totalorder %s272, %s274
      %p281 = scmp.eq.s32.totalorder %s33, 1
      %p282 = por %p280, %p281
      %p283 = scmp.ne.s32.totalorder %s274, %s275
      %p284 = scmp.eq.s32.totalorder %s33, 0
      %p285 = por %p283, %p284
      %p286 = scmp.ne.s32.totalorder %s274, %s275
      %p287 = scmp.eq.s32.totalorder %s34, 1
      %p288 = por %p286, %p287
      %p290 = scmp.ne.s32.totalorder %s275, %s289
      %p291 = scmp.eq.s32.totalorder %s34, 0
      %p292 = por %p290, %p291
      %s294 = sadd.s32 %s293, 1
      %p297 = scmp.eq.s32.totalorder %s28, 1
      %p298 = scmp.ne.s32.totalorder %s293, %s295
      %p299 = scmp.eq.s32.totalorder %s28, 0
      %p300 = por %p298, %p299
      %p301 = scmp.ne.s32.totalorder %s293, %s295
      %p302 = scmp.eq.s32.totalorder %s33, 1
      %p303 = por %p301, %p302
      %p304 = scmp.ne.s32.totalorder %s295, %s296
      %p305 = scmp.eq.s32.totalorder %s33, 0
      %p306 = por %p304, %p305
      %p307 = scmp.ne.s32.totalorder %s295, %s296
      %p308 = scmp.eq.s32.totalorder %s34, 1
      %p309 = por %p307, %p308
      %p311 = scmp.ne.s32.totalorder %s296, %s310
      %p312 = scmp.eq.s32.totalorder %s34, 0
      %p313 = por %p311, %p312
      %s314 = ssub.s32 %s28, %s35
      %p315 = scmp.eq.s32.totalorder %s314, 0
      %s317 = sadd.s32 %s316, 1
      %s318 = scalar_select %p315, %s316, %s317
      %p321 = pneg %p315
      %p322 = scmp.eq.s32.totalorder %s28, 1
      %p323 = por %p321, %p322
      %p324 = scmp.ne.s32.totalorder %s316, %s319
      %p325 = scmp.eq.s32.totalorder %s28, 0
      %p326 = por %p324, %p325
      %p327 = scmp.ne.s32.totalorder %s316, %s319
      %p328 = scmp.eq.s32.totalorder %s33, 1
      %p329 = por %p327, %p328
      %p330 = scmp.ne.s32.totalorder %s319, %s320
      %p331 = scmp.eq.s32.totalorder %s33, 0
      %p332 = por %p330, %p331
      %p333 = scmp.ne.s32.totalorder %s319, %s320
      %p334 = scmp.eq.s32.totalorder %s34, 1
      %p335 = por %p333, %p334
      %p337 = scmp.ne.s32.totalorder %s320, %s336
      %p338 = scmp.eq.s32.totalorder %s34, 0
      %p339 = por %p337, %p338
      %p340 = scmp.le.s32.totalorder 1, %s28
      %p341 = scmp.lt.s32.totalorder %s28, 3
      %p342 = pnand %p340, %p341
      %p343 = pneg %p342
      // Predicated region
      $region9: #{tpu_custom_call.1} parent=5 // pred_check
        _
      $region10: #{tpu_custom_call.1} parent=5 // pred_check_branch
        %345 = sbr.rel (%p342) target = $region12
      $region11: #{tpu_custom_call.1} parent=5 // pred_region
        %s346 = ssub.s32 %s28, 1
        // Predicated region
        $region13: #{tpu_custom_call.1} parent=11 // pred_check
          %p347 = pneg %p75
        $region14: #{tpu_custom_call.1} parent=11 // pred_check_branch
          %349 = sbr.rel (%p347) target = $region16
        $region15: #{tpu_custom_call.1} parent=11 // pred_region
          %s351 = ssub.s32 16, 16
          %352 = vsyncadd [#allocation6], %s351
          %s354 = sshll.u32 [#allocation5], 4
          %s355 = int_to_ptr.vmem [resolvable:$true] %s354
          %357 = dma.hbm_to_vmem [thread:$0]  %s1, 16, %s355, [#allocation6]
        $region16: #{tpu_custom_call.1} parent=11 // pred_fallthru
          _
        // Predicated region
        $region17: #{tpu_custom_call.1} parent=11 // pred_check
          %p358 = pneg %p96
        $region18: #{tpu_custom_call.1} parent=11 // pred_check_branch
          %360 = sbr.rel (%p358) target = $region20
        $region19: #{tpu_custom_call.1} parent=11 // pred_region
          %s362 = ssub.s32 16, 16
          %363 = vsyncadd [#allocation6], %s362
          %s365 = sshll.u32 [#allocation7], 4
          %s366 = int_to_ptr.vmem [resolvable:$true] %s365
          %368 = dma.hbm_to_vmem [thread:$0]  %s2, 16, %s366, [#allocation6]
        $region20: #{tpu_custom_call.1} parent=11 // pred_fallthru
          _
        // Predicated region
        $region21: #{tpu_custom_call.1} parent=11 // pred_check
          %p369 = pneg %p117
        $region22: #{tpu_custom_call.1} parent=11 // pred_check_branch
          %371 = sbr.rel (%p369) target = $region24
        $region23: #{tpu_custom_call.1} parent=11 // pred_region
          %s373 = ssub.s32 6144, 6144
          %374 = vsyncadd [#allocation9], %s373
          %s375 = sshll.u32 [#allocation8], 4
          %s376 = int_to_ptr.vmem [resolvable:$true] %s375
          %381 = dma.hbm_to_vmem [thread:$0]  %s3, 6144, %s376, [#allocation9], 384, 384, 24
        $region24: #{tpu_custom_call.1} parent=11 // pred_fallthru
          _
        // Predicated region
        $region25: #{tpu_custom_call.1} parent=11 // pred_check
          %p382 = pneg %p138
        $region26: #{tpu_custom_call.1} parent=11 // pred_check_branch
          %384 = sbr.rel (%p382) target = $region28
        $region27: #{tpu_custom_call.1} parent=11 // pred_region
          _
        $region28: #{tpu_custom_call.1} parent=11 // pred_fallthru
          _
        // Predicated region
        $region29: #{tpu_custom_call.1} parent=11 // pred_check
          %p385 = pneg %p159
        $region30: #{tpu_custom_call.1} parent=11 // pred_check_branch
          %387 = sbr.rel (%p385) target = $region32
        $region31: #{tpu_custom_call.1} parent=11 // pred_region
          %s389 = ssub.s32 2048, 2048
          %390 = vsyncadd [#allocation9], %s389
          %s391 = sshll.u32 [#allocation10], 4
          %s392 = int_to_ptr.vmem [resolvable:$true] %s391
          %397 = dma.hbm_to_vmem [thread:$0]  %s5, 2048, %s392, [#allocation9], 128, 128, 8
        $region32: #{tpu_custom_call.1} parent=11 // pred_fallthru
          _
        // Predicated region
        $region33: #{tpu_custom_call.1} parent=11 // pred_check
          %p398 = pneg %p180
        $region34: #{tpu_custom_call.1} parent=11 // pred_check_branch
          %400 = sbr.rel (%p398) target = $region36
        $region35: #{tpu_custom_call.1} parent=11 // pred_region
          _
        $region36: #{tpu_custom_call.1} parent=11 // pred_fallthru
          _
        // Predicated region
        $region37: #{tpu_custom_call.1} parent=11 // pred_check
          %p401 = pneg %p201
        $region38: #{tpu_custom_call.1} parent=11 // pred_check_branch
          %403 = sbr.rel (%p401) target = $region40
        $region39: #{tpu_custom_call.1} parent=11 // pred_region
          _
        $region40: #{tpu_custom_call.1} parent=11 // pred_fallthru
          _
        // Predicated region
        $region41: #{tpu_custom_call.1} parent=11 // pred_check
          %p404 = pneg %p222
        $region42: #{tpu_custom_call.1} parent=11 // pred_check_branch
          %406 = sbr.rel (%p404) target = $region44
        $region43: #{tpu_custom_call.1} parent=11 // pred_region
          _
        $region44: #{tpu_custom_call.1} parent=11 // pred_fallthru
          _
        // Predicated region
        $region45: #{tpu_custom_call.1} parent=11 // pred_check
          %p407 = pneg %p243
        $region46: #{tpu_custom_call.1} parent=11 // pred_check_branch
          %409 = sbr.rel (%p407) target = $region48
        $region47: #{tpu_custom_call.1} parent=11 // pred_region
          %s411 = ssub.s32 8192, 8192
          %412 = vsyncadd [#allocation12], %s411
          %s413 = sshll.u32 [#allocation11], 4
          %s414 = int_to_ptr.vmem [resolvable:$true] %s413
          %419 = dma.hbm_to_vmem [thread:$0]  %s9, 8192, %s414, [#allocation12], 512, 512, 32
        $region48: #{tpu_custom_call.1} parent=11 // pred_fallthru
          _
        // Predicated region
        $region49: #{tpu_custom_call.1} parent=11 // pred_check
          %p420 = pneg %p264
        $region50: #{tpu_custom_call.1} parent=11 // pred_check_branch
          %422 = sbr.rel (%p420) target = $region52
        $region51: #{tpu_custom_call.1} parent=11 // pred_region
          _
        $region52: #{tpu_custom_call.1} parent=11 // pred_fallthru
          _
        // Predicated region
        $region53: #{tpu_custom_call.1} parent=11 // pred_check
          %p423 = pneg %p285
        $region54: #{tpu_custom_call.1} parent=11 // pred_check_branch
          %425 = sbr.rel (%p423) target = $region56
        $region55: #{tpu_custom_call.1} parent=11 // pred_region
          %s427 = ssub.s32 8192, 8192
          %428 = vsyncadd [#allocation12], %s427
          %s429 = sshll.u32 [#allocation13], 4
          %s430 = int_to_ptr.vmem [resolvable:$true] %s429
          %435 = dma.hbm_to_vmem [thread:$0]  %s11, 8192, %s430, [#allocation12], 128, 128, 8
        $region56: #{tpu_custom_call.1} parent=11 // pred_fallthru
          _
        // Predicated region
        $region57: #{tpu_custom_call.1} parent=11 // pred_check
          %p436 = pneg %p306
        $region58: #{tpu_custom_call.1} parent=11 // pred_check_branch
          %438 = sbr.rel (%p436) target = $region60
        $region59: #{tpu_custom_call.1} parent=11 // pred_region
          _
        $region60: #{tpu_custom_call.1} parent=11 // pred_fallthru
          _
      $region12: #{tpu_custom_call.1} parent=5 // pred_fallthru
        _
      %p439 = scmp.lt.s32.totalorder %s28, 2
      // Predicated region
      $region61: #{tpu_custom_call.1} parent=5 // pred_check
        %p440 = pneg %p439
      $region62: #{tpu_custom_call.1} parent=5 // pred_check_branch
        %442 = sbr.rel (%p440) target = $region64
      $region63: #{tpu_custom_call.1} parent=5 // pred_region
        // Predicated region
        $region65: #{tpu_custom_call.1} parent=63 // pred_check
          %p443 = pneg %p48
        $region66: #{tpu_custom_call.1} parent=63 // pred_check_branch
          %445 = sbr.rel (%p443) target = $region68
        $region67: #{tpu_custom_call.1} parent=63 // pred_region
          %s446 = sand.u32 %s38, 1
          %s447 = scalar_lea.sflag [#allocation3], %s446
          %s448 = sand.u32 %s38, 1
          %s449 = smul.addr %s448, 16
          %s450 = scalar_lea.vmem [#allocation2], %s449
          %s452 = ssub.s32 256, 256
          %453 = vsyncadd %s447, %s452
          %s454 = smul.addr %s28, 2
          %s455 = smul.addr %s454, 128
          %s456 = scalar_lea.hbm %s0, %s455
          %s457 = sshll.u32 %s450, 4
          %s458 = int_to_ptr.vmem [resolvable:$true] %s457
          %463 = dma.hbm_to_vmem [thread:$0]  %s456, 256, %s458, %s447, 128, 128, 8
        $region68: #{tpu_custom_call.1} parent=63 // pred_fallthru
          _
      $region64: #{tpu_custom_call.1} parent=5 // pred_fallthru
        _
      %p464 = scmp.le.s32.totalorder 1, %s28
      %p465 = scmp.lt.s32.totalorder %s28, 3
      %p466 = pnand %p464, %p465
      %p467 = pneg %p466
      // Predicated region
      $region69: #{tpu_custom_call.1} parent=5 // pred_check
        _
      $region70: #{tpu_custom_call.1} parent=5 // pred_check_branch
        %469 = sbr.rel (%p466) target = $region72
      $region71: #{tpu_custom_call.1} parent=5 // pred_region
        %s470 = ssub.s32 %s28, 1
        %s471 = sand.u32 %s41, 1
        %s472 = scalar_lea.sflag [#allocation3], %s471
        %s473 = sand.u32 %s41, 1
        %s474 = smul.addr %s473, 16
        %s475 = scalar_lea.vmem [#allocation2], %s474
        // Predicated region
        $region73: #{tpu_custom_call.1} parent=71 // pred_check
          %p476 = pneg %p54
        $region74: #{tpu_custom_call.1} parent=71 // pred_check_branch
          %478 = sbr.rel (%p476) target = $region76
        $region75: #{tpu_custom_call.1} parent=71 // pred_region
          %479 = dma.done %s472, 256
        $region76: #{tpu_custom_call.1} parent=71 // pred_fallthru
          _
        // Predicated region
        $region77: #{tpu_custom_call.1} parent=71 // pred_check
          %p480 = pneg %p75
        $region78: #{tpu_custom_call.1} parent=71 // pred_check_branch
          %482 = sbr.rel (%p480) target = $region80
        $region79: #{tpu_custom_call.1} parent=71 // pred_region
          %483 = dma.done [#allocation6], 16
        $region80: #{tpu_custom_call.1} parent=71 // pred_fallthru
          _
        // Predicated region
        $region81: #{tpu_custom_call.1} parent=71 // pred_check
          %p484 = pneg %p96
        $region82: #{tpu_custom_call.1} parent=71 // pred_check_branch
          %486 = sbr.rel (%p484) target = $region84
        $region83: #{tpu_custom_call.1} parent=71 // pred_region
          %487 = dma.done [#allocation6], 16
        $region84: #{tpu_custom_call.1} parent=71 // pred_fallthru
          _
        // Predicated region
        $region85: #{tpu_custom_call.1} parent=71 // pred_check
          %p488 = pneg %p117
        $region86: #{tpu_custom_call.1} parent=71 // pred_check_branch
          %490 = sbr.rel (%p488) target = $region88
        $region87: #{tpu_custom_call.1} parent=71 // pred_region
          %491 = dma.done [#allocation9], 6144
        $region88: #{tpu_custom_call.1} parent=71 // pred_fallthru
          _
        // Predicated region
        $region89: #{tpu_custom_call.1} parent=71 // pred_check
          %p492 = pneg %p159
        $region90: #{tpu_custom_call.1} parent=71 // pred_check_branch
          %494 = sbr.rel (%p492) target = $region92
        $region91: #{tpu_custom_call.1} parent=71 // pred_region
          %495 = dma.done [#allocation9], 2048
        $region92: #{tpu_custom_call.1} parent=71 // pred_fallthru
          _
        // Predicated region
        $region93: #{tpu_custom_call.1} parent=71 // pred_check
          %p496 = pneg %p243
        $region94: #{tpu_custom_call.1} parent=71 // pred_check_branch
          %498 = sbr.rel (%p496) target = $region96
        $region95: #{tpu_custom_call.1} parent=71 // pred_region
          %499 = dma.done [#allocation12], 8192
        $region96: #{tpu_custom_call.1} parent=71 // pred_fallthru
          _
        // Predicated region
        $region97: #{tpu_custom_call.1} parent=71 // pred_check
          %p500 = pneg %p285
        $region98: #{tpu_custom_call.1} parent=71 // pred_check_branch
          %502 = sbr.rel (%p500) target = $region100
        $region99: #{tpu_custom_call.1} parent=71 // pred_region
          %503 = dma.done [#allocation12], 8192
        $region100: #{tpu_custom_call.1} parent=71 // pred_fallthru
          _
        %s504 = sand.u32 %s41, 1
        %s505 = scalar_lea.sflag [#allocation3], %s504
        %s506 = sand.u32 %s41, 1
        %s507 = smul.addr %s506, 16
        %s508 = scalar_lea.vmem [#allocation2], %s507
        %p509 = pneg %p54
        %p510 = pneg %p51
        %p511 = pneg %p75
        %p512 = pneg %p72
        %p513 = pneg %p96
        %p514 = pneg %p93
        %p515 = pneg %p117
        %p516 = pneg %p114
        %p517 = pneg %p138
        %p518 = pneg %p135
        %p519 = pneg %p159
        %p520 = pneg %p156
        %p521 = pneg %p180
        %p522 = pneg %p177
        %p523 = pneg %p201
        %p524 = pneg %p198
        %p525 = pneg %p222
        %p526 = pneg %p219
        %p527 = pneg %p243
        %p528 = pneg %p240
        %p529 = pneg %p264
        %p530 = pneg %p261
        %p531 = pneg %p285
        %p532 = pneg %p282
        %p533 = pneg %p306
        %p534 = pneg %p303
        %p535 = pneg %p332
        %p536 = pneg %p329
        %s537 = sand.u32 %s319, 1
        %s538 = scalar_lea.sflag [#allocation4], %s537
        %s539 = sand.u32 %s319, 1
        %s540 = smul.addr %s539, 16
        %s541 = scalar_lea.vmem [#allocation14], %s540
        %v542 = vld [vmem:[%s475] sm:$0xff]
        %v543 = vld [vmem:[%s475 + $0x8] sm:$0xff]
        %v544 = vld [vmem:[#allocation5] sm:$0x1]
        %v545 = vld [vmem:[#allocation7] sm:$0x1]
        %546 = vadd.xlane.f32.xlu0 %v542
        %v547 = vpop.xlane.xlu0 %546
        %548 = vadd.xlane.f32.xlu0 %v543
        %v549 = vpop.xlane.xlu0 %548
        %v550 = vrcp.pop 128.0
        %v551 = vmul.f32 %v547, %v550
        %v552 = vmul.f32 %v549, %v550
        %v553 = vsub.f32 %v542, %v551
        %v554 = vsub.f32 %v543, %v552
        %v555 = vmul.f32 %v553, %v553
        %v556 = vmul.f32 %v554, %v554
        %557 = vadd.xlane.f32.xlu0 %v555
        %v558 = vpop.xlane.xlu0 %557
        %559 = vadd.xlane.f32.xlu0 %v556
        %v560 = vpop.xlane.xlu0 %559
        %v561 = vmul.f32 %v558, %v550
        %v562 = vmul.f32 %v560, %v550
        %v563 = vadd.f32 %v561, 1e-05
        %v564 = vadd.f32 %v562, 1e-05
        %v565 = vrsqrt.pop %v563
        %v566 = vrsqrt.pop %v564
        %v567 = vmul.f32 %v553, %v565
        %v568 = vmul.f32 %v554, %v566
        %v570 = vlaneseq
        %v571 = vshrl.u32 %v570, 7
        %v572 = vsub.s32 0, %v571
        %v573 = vrot.slane %v544, %v572
        %v575 = vmul.f32 %v567, %v573
        %v576 = vmul.f32 %v568, %v573
        %v578 = vlaneseq
        %v579 = vshrl.u32 %v578, 7
        %v580 = vsub.s32 0, %v579
        %v581 = vrot.slane %v545, %v580
        %v583 = vadd.f32 %v575, %v581
        %v584 = vadd.f32 %v576, %v581
        %v585 = vld [vmem:[#allocation8] sm:$0xff]
        %v586 = vld [vmem:[#allocation8 + $0x8] sm:$0xff]
        %v587 = vld [vmem:[#allocation8 + $0x10] sm:$0xff]
        %v588 = vld [vmem:[#allocation8 + $0x18] sm:$0xff]
        %v589 = vld [vmem:[#allocation8 + $0x20] sm:$0xff]
        %v590 = vld [vmem:[#allocation8 + $0x28] sm:$0xff]
        %v591 = vld [vmem:[#allocation8 + $0x30] sm:$0xff]
        %v592 = vld [vmem:[#allocation8 + $0x38] sm:$0xff]
        %v593 = vld [vmem:[#allocation8 + $0x40] sm:$0xff]
        %v594 = vld [vmem:[#allocation8 + $0x48] sm:$0xff]
        %v595 = vld [vmem:[#allocation8 + $0x50] sm:$0xff]
        %v596 = vld [vmem:[#allocation8 + $0x58] sm:$0xff]
        %v597 = vld [vmem:[#allocation8 + $0x60] sm:$0xff]
        %v598 = vld [vmem:[#allocation8 + $0x68] sm:$0xff]
        %v599 = vld [vmem:[#allocation8 + $0x70] sm:$0xff]
        %v600 = vld [vmem:[#allocation8 + $0x78] sm:$0xff]
        %v601 = vld [vmem:[#allocation8 + $0x80] sm:$0xff]
        %v602 = vld [vmem:[#allocation8 + $0x88] sm:$0xff]
        %v603 = vld [vmem:[#allocation8 + $0x90] sm:$0xff]
        %v604 = vld [vmem:[#allocation8 + $0x98] sm:$0xff]
        %v605 = vld [vmem:[#allocation8 + $0xa0] sm:$0xff]
        %v606 = vld [vmem:[#allocation8 + $0xa8] sm:$0xff]
        %v607 = vld [vmem:[#allocation8 + $0xb0] sm:$0xff]
        %v608 = vld [vmem:[#allocation8 + $0xb8] sm:$0xff]
        %v609 = vld [vmem:[#allocation8 + $0xc0] sm:$0xff]
        %v610 = vld [vmem:[#allocation8 + $0xc8] sm:$0xff]
        %v611 = vld [vmem:[#allocation8 + $0xd0] sm:$0xff]
        %v612 = vld [vmem:[#allocation8 + $0xd8] sm:$0xff]
        %v613 = vld [vmem:[#allocation8 + $0xe0] sm:$0xff]
        %v614 = vld [vmem:[#allocation8 + $0xe8] sm:$0xff]
        %v615 = vld [vmem:[#allocation8 + $0xf0] sm:$0xff]
        %v616 = vld [vmem:[#allocation8 + $0xf8] sm:$0xff]
        %v617 = vld [vmem:[#allocation8 + $0x100] sm:$0xff]
        %v618 = vld [vmem:[#allocation8 + $0x108] sm:$0xff]
        %v619 = vld [vmem:[#allocation8 + $0x110] sm:$0xff]
        %v620 = vld [vmem:[#allocation8 + $0x118] sm:$0xff]
        %v621 = vld [vmem:[#allocation8 + $0x120] sm:$0xff]
        %v622 = vld [vmem:[#allocation8 + $0x128] sm:$0xff]
        %v623 = vld [vmem:[#allocation8 + $0x130] sm:$0xff]
        %v624 = vld [vmem:[#allocation8 + $0x138] sm:$0xff]
        %v625 = vld [vmem:[#allocation8 + $0x140] sm:$0xff]
        %v626 = vld [vmem:[#allocation8 + $0x148] sm:$0xff]
        %v627 = vld [vmem:[#allocation8 + $0x150] sm:$0xff]
        %v628 = vld [vmem:[#allocation8 + $0x158] sm:$0xff]
        %v629 = vld [vmem:[#allocation8 + $0x160] sm:$0xff]
        %v630 = vld [vmem:[#allocation8 + $0x168] sm:$0xff]
        %v631 = vld [vmem:[#allocation8 + $0x170] sm:$0xff]
        %v632 = vld [vmem:[#allocation8 + $0x178] sm:$0xff]
        %v633 = vld [vmem:[%s4] sm:$0x7]
        %v635 = vlaneseq
        %v636 = vshrl.u32 %v635, 7
        %v637 = vsub.s32 0, %v636
        %v638 = vrot.slane %v633, %v637
        %v639 = vlaneseq
        %v640 = vshrl.u32 %v639, 7
        %v641 = vsub.s32 1, %v640
        %v642 = vrot.slane %v633, %v641
        %v643 = vlaneseq
        %v644 = vshrl.u32 %v643, 7
        %v645 = vsub.s32 2, %v644
        %v646 = vrot.slane %v633, %v645
        %650 = vmatprep.subr.mxu0 %v586
        %651 = vmatpush1.msra.mxu0 %v585
        %652 = vmatprep.subr.mxu0 %v589
        %653 = vmatpush1.msra.mxu0 %v588
        %654 = vmatprep.subr.mxu0 %v592
        %655 = vmatpush1.msra.mxu0 %v591
        %656 = vmatprep.subr.mxu0 %v595
        %657 = vmatpush1.msra.mxu0 %v594
        %658 = vmatprep.subr.mxu0 %v598
        %659 = vmatpush1.msra.mxu0 %v597
        %660 = vmatprep.subr.mxu0 %v601
        %661 = vmatpush1.msra.mxu0 %v600
        %662 = vmatprep.subr.mxu0 %v604
        %663 = vmatpush1.msra.mxu0 %v603
        %664 = vmatprep.subr.mxu0 %v607
        %665 = vmatpush1.msra.mxu0 %v606
        %666 = vmatprep.subr.mxu0 %v610
        %667 = vmatpush1.msra.mxu0 %v609
        %668 = vmatprep.subr.mxu0 %v613
        %669 = vmatpush1.msra.mxu0 %v612
        %670 = vmatprep.subr.mxu0 %v616
        %671 = vmatpush1.msra.mxu0 %v615
        %672 = vmatprep.subr.mxu0 %v619
        %673 = vmatpush1.msra.mxu0 %v618
        %674 = vmatprep.subr.mxu0 %v622
        %675 = vmatpush1.msra.mxu0 %v621
        %676 = vmatprep.subr.mxu0 %v625
        %677 = vmatpush1.msra.mxu0 %v624
        %678 = vmatprep.subr.mxu0 %v628
        %679 = vmatpush1.msra.mxu0 %v627
        %680 = vmatprep.subr.mxu0 %v631
        %681 = vmatpush1.msra.mxu0 %v630
        %682 = vmatprep.subr.mxu0 0.0
        %683 = vmatpush1.msra.mxu0 0.0
        %684 = vmatprep.subr.mxu0 0.0
        %685 = vmatpush1.msra.mxu0 0.0
        %686 = vmatprep.subr.mxu0 0.0
        %687 = vmatpush1.msra.mxu0 0.0
        %688 = vmatprep.subr.mxu0 0.0
        %689 = vmatpush1.msra.mxu0 0.0
        %690 = vmatprep.subr.mxu0 0.0
        %691 = vmatpush1.msra.mxu0 0.0
        %692 = vmatprep.subr.mxu0 0.0
        %693 = vmatpush1.msra.mxu0 0.0
        %694 = vmatprep.subr.mxu0 0.0
        %695 = vmatpush1.msra.mxu0 0.0
        %696 = vmatprep.subr.mxu0 0.0
        %697 = vmatpush1.msra.mxu0 0.0
        %698 = vmatprep.subr.mxu0 0.0
        %699 = vmatpush1.msra.mxu0 0.0
        %700 = vmatprep.subr.mxu0 0.0
        %701 = vmatpush1.msra.mxu0 0.0
        %702 = vmatprep.subr.mxu0 0.0
        %703 = vmatpush1.msra.mxu0 0.0
        %704 = vmatprep.subr.mxu0 0.0
        %705 = vmatpush1.msra.mxu0 0.0
        %706 = vmatprep.subr.mxu0 0.0
        %707 = vmatpush1.msra.mxu0 0.0
        %708 = vmatprep.subr.mxu0 0.0
        %709 = vmatpush1.msra.mxu0 0.0
        %710 = vmatprep.subr.mxu0 0.0
        %711 = vmatpush1.msra.mxu0 0.0
        %712 = vmatprep.subr.mxu0 0.0
        %713 = vmatpush1.msra.mxu0 0.0
        %714 = vmatprep.mubr.f32.mxu0 0.0
        %715 = vmatmul.mubr.f32.gmra.mrb[0].mxu0 %v583
        %v716 = vpop.f32.mrb[0].mxu0
        %v717 = vadd.f32 %v638, %v716
        %v718 = vpop.f32.mrb[0].mxu0
        %v719 = vadd.f32 %v642, %v718
        %720 = vmatprep.mubr.f32.mxu0 0.0
        %721 = vmatmul.mubr.f32.gmra.mrb[0].mxu0 %v584
        %v722 = vpop.f32.mrb[0].mxu0
        %v723 = vadd.f32 %v638, %v722
        %v724 = vpop.f32.mrb[0].mxu0
        %v725 = vadd.f32 %v642, %v724
        %726 = vdwg.mxu0
        %727 = vmatprep.subr.mxu0 0.0
        %728 = vmatpush1.msra.mxu0 %v587
        %729 = vmatprep.subr.mxu0 0.0
        %730 = vmatpush1.msra.mxu0 %v590
        %731 = vmatprep.subr.mxu0 0.0
        %732 = vmatpush1.msra.mxu0 %v593
        %733 = vmatprep.subr.mxu0 0.0
        %734 = vmatpush1.msra.mxu0 %v596
        %735 = vmatprep.subr.mxu0 0.0
        %736 = vmatpush1.msra.mxu0 %v599
        %737 = vmatprep.subr.mxu0 0.0
        %738 = vmatpush1.msra.mxu0 %v602
        %739 = vmatprep.subr.mxu0 0.0
        %740 = vmatpush1.msra.mxu0 %v605
        %741 = vmatprep.subr.mxu0 0.0
        %742 = vmatpush1.msra.mxu0 %v608
        %743 = vmatprep.subr.mxu0 0.0
        %744 = vmatpush1.msra.mxu0 %v611
        %745 = vmatprep.subr.mxu0 0.0
        %746 = vmatpush1.msra.mxu0 %v614
        %747 = vmatprep.subr.mxu0 0.0
        %748 = vmatpush1.msra.mxu0 %v617
        %749 = vmatprep.subr.mxu0 0.0
        %750 = vmatpush1.msra.mxu0 %v620
        %751 = vmatprep.subr.mxu0 0.0
        %752 = vmatpush1.msra.mxu0 %v623
        %753 = vmatprep.subr.mxu0 0.0
        %754 = vmatpush1.msra.mxu0 %v626
        %755 = vmatprep.subr.mxu0 0.0
        %756 = vmatpush1.msra.mxu0 %v629
        %757 = vmatprep.subr.mxu0 0.0
        %758 = vmatpush1.msra.mxu0 %v632
        %759 = vmatprep.subr.mxu0 0.0
        %760 = vmatpush1.msra.mxu0 0.0
        %761 = vmatprep.subr.mxu0 0.0
        %762 = vmatpush1.msra.mxu0 0.0
        %763 = vmatprep.subr.mxu0 0.0
        %764 = vmatpush1.msra.mxu0 0.0
        %765 = vmatprep.subr.mxu0 0.0
        %766 = vmatpush1.msra.mxu0 0.0
        %767 = vmatprep.subr.mxu0 0.0
        %768 = vmatpush1.msra.mxu0 0.0
        %769 = vmatprep.subr.mxu0 0.0
        %770 = vmatpush1.msra.mxu0 0.0
        %771 = vmatprep.subr.mxu0 0.0
        %772 = vmatpush1.msra.mxu0 0.0
        %773 = vmatprep.subr.mxu0 0.0
        %774 = vmatpush1.msra.mxu0 0.0
        %775 = vmatprep.subr.mxu0 0.0
        %776 = vmatpush1.msra.mxu0 0.0
        %777 = vmatprep.subr.mxu0 0.0
        %778 = vmatpush1.msra.mxu0 0.0
        %779 = vmatprep.subr.mxu0 0.0
        %780 = vmatpush1.msra.mxu0 0.0
        %781 = vmatprep.subr.mxu0 0.0
        %782 = vmatpush1.msra.mxu0 0.0
        %783 = vmatprep.subr.mxu0 0.0
        %784 = vmatpush1.msra.mxu0 0.0
        %785 = vmatprep.subr.mxu0 0.0
        %786 = vmatpush1.msra.mxu0 0.0
        %787 = vmatprep.subr.mxu0 0.0
        %788 = vmatpush1.msra.mxu0 0.0
        %789 = vmatprep.subr.mxu0 0.0
        %790 = vmatpush1.msra.mxu0 0.0
        %791 = vmatprep.mubr.f32.mxu0 0.0
        %792 = vmatmul.mubr.f32.gmra.mrb[0].mxu0 %v583
        %v793 = vpop.f32.mrb[0].mxu0
        %v794 = vadd.f32 %v646, %v793
        %v795 = vpop.f32.mrb[0].mxu0
        %796 = vmatprep.mubr.f32.mxu0 0.0
        %797 = vmatmul.mubr.f32.gmra.mrb[0].mxu0 %v584
        %v798 = vpop.f32.mrb[0].mxu0
        %v799 = vadd.f32 %v646, %v798
        %v800 = vpop.f32.mrb[0].mxu0
        %801 = vdwg.mxu0
        %v802 = vmul.f32 %v717, 0.17677669
        %v803 = vmul.f32 %v723, 0.17677669
        %806 = vrot.lane.b32.xlu0 %v802, 96
        %v807 = vpop.permute.xlu0 %806
        %808 = vrot.lane.b32.xlu0 %v803, 96
        %v809 = vpop.permute.xlu0 %808
        %810 = vrot.lane.b32.xlu0 %v802, 64
        %v811 = vpop.permute.xlu0 %810
        %812 = vrot.lane.b32.xlu0 %v803, 64
        %v813 = vpop.permute.xlu0 %812
        %814 = vrot.lane.b32.xlu0 %v802, 32
        %v815 = vpop.permute.xlu0 %814
        %816 = vrot.lane.b32.xlu0 %v803, 32
        %v817 = vpop.permute.xlu0 %816
        %820 = vrot.lane.b32.xlu0 %v719, 96
        %v821 = vpop.permute.xlu0 %820
        %822 = vrot.lane.b32.xlu0 %v725, 96
        %v823 = vpop.permute.xlu0 %822
        %824 = vrot.lane.b32.xlu0 %v719, 64
        %v825 = vpop.permute.xlu0 %824
        %826 = vrot.lane.b32.xlu0 %v725, 64
        %v827 = vpop.permute.xlu0 %826
        %828 = vrot.lane.b32.xlu0 %v719, 32
        %v829 = vpop.permute.xlu0 %828
        %830 = vrot.lane.b32.xlu0 %v725, 32
        %v831 = vpop.permute.xlu0 %830
        %834 = vrot.lane.b32.xlu0 %v794, 96
        %v835 = vpop.permute.xlu0 %834
        %836 = vrot.lane.b32.xlu0 %v799, 96
        %v837 = vpop.permute.xlu0 %836
        %840 = vrot.lane.b32.xlu0 %v794, 64
        %v841 = vpop.permute.xlu0 %840
        %842 = vrot.lane.b32.xlu0 %v799, 64
        %v843 = vpop.permute.xlu0 %842
        %846 = vrot.lane.b32.xlu0 %v794, 32
        %v847 = vpop.permute.xlu0 %846
        %848 = vrot.lane.b32.xlu0 %v799, 32
        %v849 = vpop.permute.xlu0 %848
        %v852 = vlaneseq
        %v853 = vshrl.u32 %v852, 7
        %v854 = vadd.s32 %v853, 8
        %v855 = vlaneseq
        %v856 = vand.u32 %v855, 127
        %vm857 = vcmp.ge.s32.totalorder %v853, %v856
        %vm858 = vcmp.ge.s32.totalorder %v854, %v856
        %vm859 = vcmask 261120
        %v860 = vsel %vm859, %v802, 0
        %v862 = vsel %vm859, %v803, 0
        %v864 = vsel %vm859, %v719, 0
        %v866 = vsel %vm859, %v725, 0
        %868 = vmatprep.subr.mxu0 0.0
        %869 = vmatpush1.xpose.msra.mxu0 %v864
        %870 = vmatprep.subr.mxu0 0.0
        %871 = vmatpush1.xpose.msra.mxu0 %v866
        %872 = vmatprep.subr.mxu0 0.0
        %873 = vmatpush1.xpose.msra.mxu0 0.0
        %874 = vmatprep.subr.mxu0 0.0
        %875 = vmatpush1.xpose.msra.mxu0 0.0
        %876 = vmatprep.subr.mxu0 0.0
        %877 = vmatpush1.xpose.msra.mxu0 0.0
        %878 = vmatprep.subr.mxu0 0.0
        %879 = vmatpush1.xpose.msra.mxu0 0.0
        %880 = vmatprep.subr.mxu0 0.0
        %881 = vmatpush1.xpose.msra.mxu0 0.0
        %882 = vmatprep.subr.mxu0 0.0
        %883 = vmatpush1.xpose.msra.mxu0 0.0
        %884 = vmatprep.subr.mxu0 0.0
        %885 = vmatpush1.xpose.msra.mxu0 0.0
        %886 = vmatprep.subr.mxu0 0.0
        %887 = vmatpush1.xpose.msra.mxu0 0.0
        %888 = vmatprep.subr.mxu0 0.0
        %889 = vmatpush1.xpose.msra.mxu0 0.0
        %890 = vmatprep.subr.mxu0 0.0
        %891 = vmatpush1.xpose.msra.mxu0 0.0
        %892 = vmatprep.subr.mxu0 0.0
        %893 = vmatpush1.xpose.msra.mxu0 0.0
        %894 = vmatprep.subr.mxu0 0.0
        %895 = vmatpush1.xpose.msra.mxu0 0.0
        %896 = vmatprep.subr.mxu0 0.0
        %897 = vmatpush1.xpose.msra.mxu0 0.0
        %898 = vmatprep.subr.mxu0 0.0
        %899 = vmatpush1.xpose.msra.mxu0 0.0
        %900 = vmatprep.subr.mxu0 0.0
        %901 = vmatpush1.xpose.msra.mxu0 0.0
        %902 = vmatprep.subr.mxu0 0.0
        %903 = vmatpush1.xpose.msra.mxu0 0.0
        %904 = vmatprep.subr.mxu0 0.0
        %905 = vmatpush1.xpose.msra.mxu0 0.0
        %906 = vmatprep.subr.mxu0 0.0
        %907 = vmatpush1.xpose.msra.mxu0 0.0
        %908 = vmatprep.subr.mxu0 0.0
        %909 = vmatpush1.xpose.msra.mxu0 0.0
        %910 = vmatprep.subr.mxu0 0.0
        %911 = vmatpush1.xpose.msra.mxu0 0.0
        %912 = vmatprep.subr.mxu0 0.0
        %913 = vmatpush1.xpose.msra.mxu0 0.0
        %914 = vmatprep.subr.mxu0 0.0
        %915 = vmatpush1.xpose.msra.mxu0 0.0
        %916 = vmatprep.subr.mxu0 0.0
        %917 = vmatpush1.xpose.msra.mxu0 0.0
        %918 = vmatprep.subr.mxu0 0.0
        %919 = vmatpush1.xpose.msra.mxu0 0.0
        %920 = vmatprep.subr.mxu0 0.0
        %921 = vmatpush1.xpose.msra.mxu0 0.0
        %922 = vmatprep.subr.mxu0 0.0
        %923 = vmatpush1.xpose.msra.mxu0 0.0
        %924 = vmatprep.subr.mxu0 0.0
        %925 = vmatpush1.xpose.msra.mxu0 0.0
        %926 = vmatprep.subr.mxu0 0.0
        %927 = vmatpush1.xpose.msra.mxu0 0.0
        %928 = vmatprep.subr.mxu0 0.0
        %929 = vmatpush1.xpose.msra.mxu0 0.0
        %930 = vmatprep.subr.mxu0 0.0
        %931 = vmatpush1.xpose.msra.mxu0 0.0
        %932 = vmatprep.mubr.f32.mxu0 0.0
        %933 = vmatmul.mubr.f32.gmra.mrb[0].mxu0 %v860
        %v934 = vpop.f32.mrb[0].mxu0
        %v935 = vadd.f32 0.0, %v934
        %v936 = vpop.f32.mrb[0].mxu0
        %937 = vmatprep.mubr.f32.mxu0 0.0
        %938 = vmatmul.mubr.f32.gmra.mrb[0].mxu0 %v862
        %v939 = vpop.f32.mrb[0].mxu0
        %v940 = vadd.f32 0.0, %v939
        %v941 = vpop.f32.mrb[0].mxu0
        %942 = vdwg.mxu0
        %v943 = vsel %vm859, %v807, 0
        %v945 = vsel %vm859, %v809, 0
        %v947 = vsel %vm859, %v821, 0
        %v949 = vsel %vm859, %v823, 0
        %951 = vmatprep.subr.mxu0 0.0
        %952 = vmatpush1.xpose.msra.mxu0 %v947
        %953 = vmatprep.subr.mxu0 0.0
        %954 = vmatpush1.xpose.msra.mxu0 %v949
        %955 = vmatprep.subr.mxu0 0.0
        %956 = vmatpush1.xpose.msra.mxu0 0.0
        %957 = vmatprep.subr.mxu0 0.0
        %958 = vmatpush1.xpose.msra.mxu0 0.0
        %959 = vmatprep.subr.mxu0 0.0
        %960 = vmatpush1.xpose.msra.mxu0 0.0
        %961 = vmatprep.subr.mxu0 0.0
        %962 = vmatpush1.xpose.msra.mxu0 0.0
        %963 = vmatprep.subr.mxu0 0.0
        %964 = vmatpush1.xpose.msra.mxu0 0.0
        %965 = vmatprep.subr.mxu0 0.0
        %966 = vmatpush1.xpose.msra.mxu0 0.0
        %967 = vmatprep.subr.mxu0 0.0
        %968 = vmatpush1.xpose.msra.mxu0 0.0
        %969 = vmatprep.subr.mxu0 0.0
        %970 = vmatpush1.xpose.msra.mxu0 0.0
        %971 = vmatprep.subr.mxu0 0.0
        %972 = vmatpush1.xpose.msra.mxu0 0.0
        %973 = vmatprep.subr.mxu0 0.0
        %974 = vmatpush1.xpose.msra.mxu0 0.0
        %975 = vmatprep.subr.mxu0 0.0
        %976 = vmatpush1.xpose.msra.mxu0 0.0
        %977 = vmatprep.subr.mxu0 0.0
        %978 = vmatpush1.xpose.msra.mxu0 0.0
        %979 = vmatprep.subr.mxu0 0.0
        %980 = vmatpush1.xpose.msra.mxu0 0.0
        %981 = vmatprep.subr.mxu0 0.0
        %982 = vmatpush1.xpose.msra.mxu0 0.0
        %983 = vmatprep.subr.mxu0 0.0
        %984 = vmatpush1.xpose.msra.mxu0 0.0
        %985 = vmatprep.subr.mxu0 0.0
        %986 = vmatpush1.xpose.msra.mxu0 0.0
        %987 = vmatprep.subr.mxu0 0.0
        %988 = vmatpush1.xpose.msra.mxu0 0.0
        %989 = vmatprep.subr.mxu0 0.0
        %990 = vmatpush1.xpose.msra.mxu0 0.0
        %991 = vmatprep.subr.mxu0 0.0
        %992 = vmatpush1.xpose.msra.mxu0 0.0
        %993 = vmatprep.subr.mxu0 0.0
        %994 = vmatpush1.xpose.msra.mxu0 0.0
        %995 = vmatprep.subr.mxu0 0.0
        %996 = vmatpush1.xpose.msra.mxu0 0.0
        %997 = vmatprep.subr.mxu0 0.0
        %998 = vmatpush1.xpose.msra.mxu0 0.0
        %999 = vmatprep.subr.mxu0 0.0
        %1000 = vmatpush1.xpose.msra.mxu0 0.0
        %1001 = vmatprep.subr.mxu0 0.0
        %1002 = vmatpush1.xpose.msra.mxu0 0.0
        %1003 = vmatprep.subr.mxu0 0.0
        %1004 = vmatpush1.xpose.msra.mxu0 0.0
        %1005 = vmatprep.subr.mxu0 0.0
        %1006 = vmatpush1.xpose.msra.mxu0 0.0
        %1007 = vmatprep.subr.mxu0 0.0
        %1008 = vmatpush1.xpose.msra.mxu0 0.0
        %1009 = vmatprep.subr.mxu0 0.0
        %1010 = vmatpush1.xpose.msra.mxu0 0.0
        %1011 = vmatprep.subr.mxu0 0.0
        %1012 = vmatpush1.xpose.msra.mxu0 0.0
        %1013 = vmatprep.subr.mxu0 0.0
        %1014 = vmatpush1.xpose.msra.mxu0 0.0
        %1015 = vmatprep.mubr.f32.mxu0 0.0
        %1016 = vmatmul.mubr.f32.gmra.mrb[0].mxu0 %v943
        %v1017 = vpop.f32.mrb[0].mxu0
        %v1018 = vadd.f32 0.0, %v1017
        %v1019 = vpop.f32.mrb[0].mxu0
        %1020 = vmatprep.mubr.f32.mxu0 0.0
        %1021 = vmatmul.mubr.f32.gmra.mrb[0].mxu0 %v945
        %v1022 = vpop.f32.mrb[0].mxu0
        %v1023 = vadd.f32 0.0, %v1022
        %v1024 = vpop.f32.mrb[0].mxu0
        %1025 = vdwg.mxu0
        %v1026 = vsel %vm859, %v811, 0
        %v1028 = vsel %vm859, %v813, 0
        %v1030 = vsel %vm859, %v825, 0
        %v1032 = vsel %vm859, %v827, 0
        %1034 = vmatprep.subr.mxu0 0.0
        %1035 = vmatpush1.xpose.msra.mxu0 %v1030
        %1036 = vmatprep.subr.mxu0 0.0
        %1037 = vmatpush1.xpose.msra.mxu0 %v1032
        %1038 = vmatprep.subr.mxu0 0.0
        %1039 = vmatpush1.xpose.msra.mxu0 0.0
        %1040 = vmatprep.subr.mxu0 0.0
        %1041 = vmatpush1.xpose.msra.mxu0 0.0
        %1042 = vmatprep.subr.mxu0 0.0
        %1043 = vmatpush1.xpose.msra.mxu0 0.0
        %1044 = vmatprep.subr.mxu0 0.0
        %1045 = vmatpush1.xpose.msra.mxu0 0.0
        %1046 = vmatprep.subr.mxu0 0.0
        %1047 = vmatpush1.xpose.msra.mxu0 0.0
        %1048 = vmatprep.subr.mxu0 0.0
        %1049 = vmatpush1.xpose.msra.mxu0 0.0
        %1050 = vmatprep.subr.mxu0 0.0
        %1051 = vmatpush1.xpose.msra.mxu0 0.0
        %1052 = vmatprep.subr.mxu0 0.0
        %1053 = vmatpush1.xpose.msra.mxu0 0.0
        %1054 = vmatprep.subr.mxu0 0.0
        %1055 = vmatpush1.xpose.msra.mxu0 0.0
        %1056 = vmatprep.subr.mxu0 0.0
        %1057 = vmatpush1.xpose.msra.mxu0 0.0
        %1058 = vmatprep.subr.mxu0 0.0
        %1059 = vmatpush1.xpose.msra.mxu0 0.0
        %1060 = vmatprep.subr.mxu0 0.0
        %1061 = vmatpush1.xpose.msra.mxu0 0.0
        %1062 = vmatprep.subr.mxu0 0.0
        %1063 = vmatpush1.xpose.msra.mxu0 0.0
        %1064 = vmatprep.subr.mxu0 0.0
        %1065 = vmatpush1.xpose.msra.mxu0 0.0
        %1066 = vmatprep.subr.mxu0 0.0
        %1067 = vmatpush1.xpose.msra.mxu0 0.0
        %1068 = vmatprep.subr.mxu0 0.0
        %1069 = vmatpush1.xpose.msra.mxu0 0.0
        %1070 = vmatprep.subr.mxu0 0.0
        %1071 = vmatpush1.xpose.msra.mxu0 0.0
        %1072 = vmatprep.subr.mxu0 0.0
        %1073 = vmatpush1.xpose.msra.mxu0 0.0
        %1074 = vmatprep.subr.mxu0 0.0
        %1075 = vmatpush1.xpose.msra.mxu0 0.0
        %1076 = vmatprep.subr.mxu0 0.0
        %1077 = vmatpush1.xpose.msra.mxu0 0.0
        %1078 = vmatprep.subr.mxu0 0.0
        %1079 = vmatpush1.xpose.msra.mxu0 0.0
        %1080 = vmatprep.subr.mxu0 0.0
        %1081 = vmatpush1.xpose.msra.mxu0 0.0
        %1082 = vmatprep.subr.mxu0 0.0
        %1083 = vmatpush1.xpose.msra.mxu0 0.0
        %1084 = vmatprep.subr.mxu0 0.0
        %1085 = vmatpush1.xpose.msra.mxu0 0.0
        %1086 = vmatprep.subr.mxu0 0.0
        %1087 = vmatpush1.xpose.msra.mxu0 0.0
        %1088 = vmatprep.subr.mxu0 0.0
        %1089 = vmatpush1.xpose.msra.mxu0 0.0
        %1090 = vmatprep.subr.mxu0 0.0
        %1091 = vmatpush1.xpose.msra.mxu0 0.0
        %1092 = vmatprep.subr.mxu0 0.0
        %1093 = vmatpush1.xpose.msra.mxu0 0.0
        %1094 = vmatprep.subr.mxu0 0.0
        %1095 = vmatpush1.xpose.msra.mxu0 0.0
        %1096 = vmatprep.subr.mxu0 0.0
        %1097 = vmatpush1.xpose.msra.mxu0 0.0
        %1098 = vmatprep.mubr.f32.mxu0 0.0
        %1099 = vmatmul.mubr.f32.gmra.mrb[0].mxu0 %v1026
        %v1100 = vpop.f32.mrb[0].mxu0
        %v1101 = vadd.f32 0.0, %v1100
        %v1102 = vpop.f32.mrb[0].mxu0
        %1103 = vmatprep.mubr.f32.mxu0 0.0
        %1104 = vmatmul.mubr.f32.gmra.mrb[0].mxu0 %v1028
        %v1105 = vpop.f32.mrb[0].mxu0
        %v1106 = vadd.f32 0.0, %v1105
        %v1107 = vpop.f32.mrb[0].mxu0
        %1108 = vdwg.mxu0
        %v1109 = vsel %vm859, %v815, 0
        %v1111 = vsel %vm859, %v817, 0
        %v1113 = vsel %vm859, %v829, 0
        %v1115 = vsel %vm859, %v831, 0
        %1117 = vmatprep.subr.mxu0 0.0
        %1118 = vmatpush1.xpose.msra.mxu0 %v1113
        %1119 = vmatprep.subr.mxu0 0.0
        %1120 = vmatpush1.xpose.msra.mxu0 %v1115
        %1121 = vmatprep.subr.mxu0 0.0
        %1122 = vmatpush1.xpose.msra.mxu0 0.0
        %1123 = vmatprep.subr.mxu0 0.0
        %1124 = vmatpush1.xpose.msra.mxu0 0.0
        %1125 = vmatprep.subr.mxu0 0.0
        %1126 = vmatpush1.xpose.msra.mxu0 0.0
        %1127 = vmatprep.subr.mxu0 0.0
        %1128 = vmatpush1.xpose.msra.mxu0 0.0
        %1129 = vmatprep.subr.mxu0 0.0
        %1130 = vmatpush1.xpose.msra.mxu0 0.0
        %1131 = vmatprep.subr.mxu0 0.0
        %1132 = vmatpush1.xpose.msra.mxu0 0.0
        %1133 = vmatprep.subr.mxu0 0.0
        %1134 = vmatpush1.xpose.msra.mxu0 0.0
        %1135 = vmatprep.subr.mxu0 0.0
        %1136 = vmatpush1.xpose.msra.mxu0 0.0
        %1137 = vmatprep.subr.mxu0 0.0
        %1138 = vmatpush1.xpose.msra.mxu0 0.0
        %1139 = vmatprep.subr.mxu0 0.0
        %1140 = vmatpush1.xpose.msra.mxu0 0.0
        %1141 = vmatprep.subr.mxu0 0.0
        %1142 = vmatpush1.xpose.msra.mxu0 0.0
        %1143 = vmatprep.subr.mxu0 0.0
        %1144 = vmatpush1.xpose.msra.mxu0 0.0
        %1145 = vmatprep.subr.mxu0 0.0
        %1146 = vmatpush1.xpose.msra.mxu0 0.0
        %1147 = vmatprep.subr.mxu0 0.0
        %1148 = vmatpush1.xpose.msra.mxu0 0.0
        %1149 = vmatprep.subr.mxu0 0.0
        %1150 = vmatpush1.xpose.msra.mxu0 0.0
        %1151 = vmatprep.subr.mxu0 0.0
        %1152 = vmatpush1.xpose.msra.mxu0 0.0
        %1153 = vmatprep.subr.mxu0 0.0
        %1154 = vmatpush1.xpose.msra.mxu0 0.0
        %1155 = vmatprep.subr.mxu0 0.0
        %1156 = vmatpush1.xpose.msra.mxu0 0.0
        %1157 = vmatprep.subr.mxu0 0.0
        %1158 = vmatpush1.xpose.msra.mxu0 0.0
        %1159 = vmatprep.subr.mxu0 0.0
        %1160 = vmatpush1.xpose.msra.mxu0 0.0
        %1161 = vmatprep.subr.mxu0 0.0
        %1162 = vmatpush1.xpose.msra.mxu0 0.0
        %1163 = vmatprep.subr.mxu0 0.0
        %1164 = vmatpush1.xpose.msra.mxu0 0.0
        %1165 = vmatprep.subr.mxu0 0.0
        %1166 = vmatpush1.xpose.msra.mxu0 0.0
        %1167 = vmatprep.subr.mxu0 0.0
        %1168 = vmatpush1.xpose.msra.mxu0 0.0
        %1169 = vmatprep.subr.mxu0 0.0
        %1170 = vmatpush1.xpose.msra.mxu0 0.0
        %1171 = vmatprep.subr.mxu0 0.0
        %1172 = vmatpush1.xpose.msra.mxu0 0.0
        %1173 = vmatprep.subr.mxu0 0.0
        %1174 = vmatpush1.xpose.msra.mxu0 0.0
        %1175 = vmatprep.subr.mxu0 0.0
        %1176 = vmatpush1.xpose.msra.mxu0 0.0
        %1177 = vmatprep.subr.mxu0 0.0
        %1178 = vmatpush1.xpose.msra.mxu0 0.0
        %1179 = vmatprep.subr.mxu0 0.0
        %1180 = vmatpush1.xpose.msra.mxu0 0.0
        %1181 = vmatprep.mubr.f32.mxu0 0.0
        %1182 = vmatmul.mubr.f32.gmra.mrb[0].mxu0 %v1109
        %v1183 = vpop.f32.mrb[0].mxu0
        %v1184 = vadd.f32 0.0, %v1183
        %v1185 = vpop.f32.mrb[0].mxu0
        %1186 = vmatprep.mubr.f32.mxu0 0.0
        %1187 = vmatmul.mubr.f32.gmra.mrb[0].mxu0 %v1111
        %v1188 = vpop.f32.mrb[0].mxu0
        %v1189 = vadd.f32 0.0, %v1188
        %v1190 = vpop.f32.mrb[0].mxu0
        %1191 = vdwg.mxu0
        %v1192 = vsel %vm857, 1, 0
        %v1193 = vsel %vm858, 1, 0
        %vm1194 = vcmp.eq.s32.totalorder %v1192, 1
        %vm1195 = vcmp.eq.s32.totalorder %v1193, 1
        %v1196 = vsel %vm1194, %v935, -1e+30
        %v1197 = vsel %vm1195, %v940, -1e+30
        %v1198 = vsel %vm1194, %v1018, -1e+30
        %v1199 = vsel %vm1195, %v1023, -1e+30
        %v1200 = vsel %vm1194, %v1101, -1e+30
        %v1201 = vsel %vm1195, %v1106, -1e+30
        %v1202 = vsel %vm1194, %v1184, -1e+30
        %v1203 = vsel %vm1195, %v1189, -1e+30
        %vm1204 = vcmask 130048
        %v1205 = vsel %vm1204, %v1196, -inf
        %1206 = vmax.xlane.f32.xlu0 %v1205
        %v1207 = vpop.xlane.xlu0 %1206
        %v1208 = vsel %vm1204, %v1197, -inf
        %1209 = vmax.xlane.f32.xlu0 %v1208
        %v1210 = vpop.xlane.xlu0 %1209
        %v1211 = vsel %vm1204, %v1198, -inf
        %1212 = vmax.xlane.f32.xlu0 %v1211
        %v1213 = vpop.xlane.xlu0 %1212
        %v1214 = vsel %vm1204, %v1199, -inf
        %1215 = vmax.xlane.f32.xlu0 %v1214
        %v1216 = vpop.xlane.xlu0 %1215
        %v1217 = vsel %vm1204, %v1200, -inf
        %1218 = vmax.xlane.f32.xlu0 %v1217
        %v1219 = vpop.xlane.xlu0 %1218
        %v1220 = vsel %vm1204, %v1201, -inf
        %1221 = vmax.xlane.f32.xlu0 %v1220
        %v1222 = vpop.xlane.xlu0 %1221
        %v1223 = vsel %vm1204, %v1202, -inf
        %1224 = vmax.xlane.f32.xlu0 %v1223
        %v1225 = vpop.xlane.xlu0 %1224
        %v1226 = vsel %vm1204, %v1203, -inf
        %1227 = vmax.xlane.f32.xlu0 %v1226
        %v1228 = vpop.xlane.xlu0 %1227
        %v1229 = vsub.f32 %v1196, %v1207
        %v1230 = vsub.f32 %v1197, %v1210
        %v1231 = vsub.f32 %v1198, %v1213
        %v1232 = vsub.f32 %v1199, %v1216
        %v1233 = vsub.f32 %v1200, %v1219
        %v1234 = vsub.f32 %v1201, %v1222
        %v1235 = vsub.f32 %v1202, %v1225
        %v1236 = vsub.f32 %v1203, %v1228
        %v1237 = vmul.f32 %v1229, 1.442695
        %v1238 = vpow.pop %v1237
        %v1239 = vmul.f32 %v1230, 1.442695
        %v1240 = vpow.pop %v1239
        %v1241 = vmul.f32 %v1231, 1.442695
        %v1242 = vpow.pop %v1241
        %v1243 = vmul.f32 %v1232, 1.442695
        %v1244 = vpow.pop %v1243
        %v1245 = vmul.f32 %v1233, 1.442695
        %v1246 = vpow.pop %v1245
        %v1247 = vmul.f32 %v1234, 1.442695
        %v1248 = vpow.pop %v1247
        %v1249 = vmul.f32 %v1235, 1.442695
        %v1250 = vpow.pop %v1249
        %v1251 = vmul.f32 %v1236, 1.442695
        %v1252 = vpow.pop %v1251
        %v1253 = vsel %vm1204, %v1238, 0.0
        %1254 = vadd.xlane.f32.xlu0 %v1253
        %v1255 = vpop.xlane.xlu0 %1254
        %v1256 = vsel %vm1204, %v1240, 0.0
        %1257 = vadd.xlane.f32.xlu0 %v1256
        %v1258 = vpop.xlane.xlu0 %1257
        %v1259 = vsel %vm1204, %v1242, 0.0
        %1260 = vadd.xlane.f32.xlu0 %v1259
        %v1261 = vpop.xlane.xlu0 %1260
        %v1262 = vsel %vm1204, %v1244, 0.0
        %1263 = vadd.xlane.f32.xlu0 %v1262
        %v1264 = vpop.xlane.xlu0 %1263
        %v1265 = vsel %vm1204, %v1246, 0.0
        %1266 = vadd.xlane.f32.xlu0 %v1265
        %v1267 = vpop.xlane.xlu0 %1266
        %v1268 = vsel %vm1204, %v1248, 0.0
        %1269 = vadd.xlane.f32.xlu0 %v1268
        %v1270 = vpop.xlane.xlu0 %1269
        %v1271 = vsel %vm1204, %v1250, 0.0
        %1272 = vadd.xlane.f32.xlu0 %v1271
        %v1273 = vpop.xlane.xlu0 %1272
        %v1274 = vsel %vm1204, %v1252, 0.0
        %1275 = vadd.xlane.f32.xlu0 %v1274
        %v1276 = vpop.xlane.xlu0 %1275
        %v1277 = vrcp.pop %v1255
        %v1278 = vrcp.pop %v1258
        %v1279 = vrcp.pop %v1261
        %v1280 = vrcp.pop %v1264
        %v1281 = vrcp.pop %v1267
        %v1282 = vrcp.pop %v1270
        %v1283 = vrcp.pop %v1273
        %v1284 = vrcp.pop %v1276
        %v1285 = vmul.f32 %v1238, %v1277
        %v1286 = vmul.f32 %v1240, %v1278
        %v1287 = vmul.f32 %v1242, %v1279
        %v1288 = vmul.f32 %v1244, %v1280
        %v1289 = vmul.f32 %v1246, %v1281
        %v1290 = vmul.f32 %v1248, %v1282
        %v1291 = vmul.f32 %v1250, %v1283
        %v1292 = vmul.f32 %v1252, %v1284
        %v1294 = vsel %vm1204, %v1285, 0
        %v1297 = vsel %vm1204, %v1286, 0
        %1299 = vmatprep.subr.mxu0 0.0
        %1300 = vmatpush1.msra.mxu0 %v794
        %1301 = vmatprep.subr.mxu0 0.0
        %1302 = vmatpush1.msra.mxu0 %v799
        %1303 = vmatprep.subr.mxu0 0.0
        %1304 = vmatpush1.msra.mxu0 0.0
        %1305 = vmatprep.subr.mxu0 0.0
        %1306 = vmatpush1.msra.mxu0 0.0
        %1307 = vmatprep.subr.mxu0 0.0
        %1308 = vmatpush1.msra.mxu0 0.0
        %1309 = vmatprep.subr.mxu0 0.0
        %1310 = vmatpush1.msra.mxu0 0.0
        %1311 = vmatprep.subr.mxu0 0.0
        %1312 = vmatpush1.msra.mxu0 0.0
        %1313 = vmatprep.subr.mxu0 0.0
        %1314 = vmatpush1.msra.mxu0 0.0
        %1315 = vmatprep.subr.mxu0 0.0
        %1316 = vmatpush1.msra.mxu0 0.0
        %1317 = vmatprep.subr.mxu0 0.0
        %1318 = vmatpush1.msra.mxu0 0.0
        %1319 = vmatprep.subr.mxu0 0.0
        %1320 = vmatpush1.msra.mxu0 0.0
        %1321 = vmatprep.subr.mxu0 0.0
        %1322 = vmatpush1.msra.mxu0 0.0
        %1323 = vmatprep.subr.mxu0 0.0
        %1324 = vmatpush1.msra.mxu0 0.0
        %1325 = vmatprep.subr.mxu0 0.0
        %1326 = vmatpush1.msra.mxu0 0.0
        %1327 = vmatprep.subr.mxu0 0.0
        %1328 = vmatpush1.msra.mxu0 0.0
        %1329 = vmatprep.subr.mxu0 0.0
        %1330 = vmatpush1.msra.mxu0 0.0
        %1331 = vmatprep.subr.mxu0 0.0
        %1332 = vmatpush1.msra.mxu0 0.0
        %1333 = vmatprep.subr.mxu0 0.0
        %1334 = vmatpush1.msra.mxu0 0.0
        %1335 = vmatprep.subr.mxu0 0.0
        %1336 = vmatpush1.msra.mxu0 0.0
        %1337 = vmatprep.subr.mxu0 0.0
        %1338 = vmatpush1.msra.mxu0 0.0
        %1339 = vmatprep.subr.mxu0 0.0
        %1340 = vmatpush1.msra.mxu0 0.0
        %1341 = vmatprep.subr.mxu0 0.0
        %1342 = vmatpush1.msra.mxu0 0.0
        %1343 = vmatprep.subr.mxu0 0.0
        %1344 = vmatpush1.msra.mxu0 0.0
        %1345 = vmatprep.subr.mxu0 0.0
        %1346 = vmatpush1.msra.mxu0 0.0
        %1347 = vmatprep.subr.mxu0 0.0
        %1348 = vmatpush1.msra.mxu0 0.0
        %1349 = vmatprep.subr.mxu0 0.0
        %1350 = vmatpush1.msra.mxu0 0.0
        %1351 = vmatprep.subr.mxu0 0.0
        %1352 = vmatpush1.msra.mxu0 0.0
        %1353 = vmatprep.subr.mxu0 0.0
        %1354 = vmatpush1.msra.mxu0 0.0
        %1355 = vmatprep.subr.mxu0 0.0
        %1356 = vmatpush1.msra.mxu0 0.0
        %1357 = vmatprep.subr.mxu0 0.0
        %1358 = vmatpush1.msra.mxu0 0.0
        %1359 = vmatprep.subr.mxu0 0.0
        %1360 = vmatpush1.msra.mxu0 0.0
        %1361 = vmatprep.subr.mxu0 0.0
        %1362 = vmatpush1.msra.mxu0 0.0
        %1363 = vmatprep.mubr.f32.mxu0 0.0
        %1364 = vmatmul.mubr.f32.gmra.mrb[0].mxu0 %v1294
        %v1365 = vpop.f32.mrb[0].mxu0
        %v1366 = vadd.f32 0.0, %v1365
        %v1367 = vpop.f32.mrb[0].mxu0
        %1368 = vmatprep.mubr.f32.mxu0 0.0
        %1369 = vmatmul.mubr.f32.gmra.mrb[0].mxu0 %v1297
        %v1370 = vpop.f32.mrb[0].mxu0
        %v1371 = vadd.f32 0.0, %v1370
        %v1372 = vpop.f32.mrb[0].mxu0
        %1373 = vdwg.mxu0
        %v1375 = vsel %vm1204, %v1287, 0
        %v1378 = vsel %vm1204, %v1288, 0
        %1380 = vmatprep.subr.mxu0 0.0
        %1381 = vmatpush1.msra.mxu0 %v835
        %1382 = vmatprep.subr.mxu0 0.0
        %1383 = vmatpush1.msra.mxu0 %v837
        %1384 = vmatprep.subr.mxu0 0.0
        %1385 = vmatpush1.msra.mxu0 0.0
        %1386 = vmatprep.subr.mxu0 0.0
        %1387 = vmatpush1.msra.mxu0 0.0
        %1388 = vmatprep.subr.mxu0 0.0
        %1389 = vmatpush1.msra.mxu0 0.0
        %1390 = vmatprep.subr.mxu0 0.0
        %1391 = vmatpush1.msra.mxu0 0.0
        %1392 = vmatprep.subr.mxu0 0.0
        %1393 = vmatpush1.msra.mxu0 0.0
        %1394 = vmatprep.subr.mxu0 0.0
        %1395 = vmatpush1.msra.mxu0 0.0
        %1396 = vmatprep.subr.mxu0 0.0
        %1397 = vmatpush1.msra.mxu0 0.0
        %1398 = vmatprep.subr.mxu0 0.0
        %1399 = vmatpush1.msra.mxu0 0.0
        %1400 = vmatprep.subr.mxu0 0.0
        %1401 = vmatpush1.msra.mxu0 0.0
        %1402 = vmatprep.subr.mxu0 0.0
        %1403 = vmatpush1.msra.mxu0 0.0
        %1404 = vmatprep.subr.mxu0 0.0
        %1405 = vmatpush1.msra.mxu0 0.0
        %1406 = vmatprep.subr.mxu0 0.0
        %1407 = vmatpush1.msra.mxu0 0.0
        %1408 = vmatprep.subr.mxu0 0.0
        %1409 = vmatpush1.msra.mxu0 0.0
        %1410 = vmatprep.subr.mxu0 0.0
        %1411 = vmatpush1.msra.mxu0 0.0
        %1412 = vmatprep.subr.mxu0 0.0
        %1413 = vmatpush1.msra.mxu0 0.0
        %1414 = vmatprep.subr.mxu0 0.0
        %1415 = vmatpush1.msra.mxu0 0.0
        %1416 = vmatprep.subr.mxu0 0.0
        %1417 = vmatpush1.msra.mxu0 0.0
        %1418 = vmatprep.subr.mxu0 0.0
        %1419 = vmatpush1.msra.mxu0 0.0
        %1420 = vmatprep.subr.mxu0 0.0
        %1421 = vmatpush1.msra.mxu0 0.0
        %1422 = vmatprep.subr.mxu0 0.0
        %1423 = vmatpush1.msra.mxu0 0.0
        %1424 = vmatprep.subr.mxu0 0.0
        %1425 = vmatpush1.msra.mxu0 0.0
        %1426 = vmatprep.subr.mxu0 0.0
        %1427 = vmatpush1.msra.mxu0 0.0
        %1428 = vmatprep.subr.mxu0 0.0
        %1429 = vmatpush1.msra.mxu0 0.0
        %1430 = vmatprep.subr.mxu0 0.0
        %1431 = vmatpush1.msra.mxu0 0.0
        %1432 = vmatprep.subr.mxu0 0.0
        %1433 = vmatpush1.msra.mxu0 0.0
        %1434 = vmatprep.subr.mxu0 0.0
        %1435 = vmatpush1.msra.mxu0 0.0
        %1436 = vmatprep.subr.mxu0 0.0
        %1437 = vmatpush1.msra.mxu0 0.0
        %1438 = vmatprep.subr.mxu0 0.0
        %1439 = vmatpush1.msra.mxu0 0.0
        %1440 = vmatprep.subr.mxu0 0.0
        %1441 = vmatpush1.msra.mxu0 0.0
        %1442 = vmatprep.subr.mxu0 0.0
        %1443 = vmatpush1.msra.mxu0 0.0
        %1444 = vmatprep.mubr.f32.mxu0 0.0
        %1445 = vmatmul.mubr.f32.gmra.mrb[0].mxu0 %v1375
        %v1446 = vpop.f32.mrb[0].mxu0
        %v1447 = vadd.f32 0.0, %v1446
        %v1448 = vpop.f32.mrb[0].mxu0
        %1449 = vmatprep.mubr.f32.mxu0 0.0
        %1450 = vmatmul.mubr.f32.gmra.mrb[0].mxu0 %v1378
        %v1451 = vpop.f32.mrb[0].mxu0
        %v1452 = vadd.f32 0.0, %v1451
        %v1453 = vpop.f32.mrb[0].mxu0
        %1454 = vdwg.mxu0
        %v1456 = vsel %vm1204, %v1289, 0
        %v1459 = vsel %vm1204, %v1290, 0
        %1461 = vmatprep.subr.mxu0 0.0
        %1462 = vmatpush1.msra.mxu0 %v841
        %1463 = vmatprep.subr.mxu0 0.0
        %1464 = vmatpush1.msra.mxu0 %v843
        %1465 = vmatprep.subr.mxu0 0.0
        %1466 = vmatpush1.msra.mxu0 0.0
        %1467 = vmatprep.subr.mxu0 0.0
        %1468 = vmatpush1.msra.mxu0 0.0
        %1469 = vmatprep.subr.mxu0 0.0
        %1470 = vmatpush1.msra.mxu0 0.0
        %1471 = vmatprep.subr.mxu0 0.0
        %1472 = vmatpush1.msra.mxu0 0.0
        %1473 = vmatprep.subr.mxu0 0.0
        %1474 = vmatpush1.msra.mxu0 0.0
        %1475 = vmatprep.subr.mxu0 0.0
        %1476 = vmatpush1.msra.mxu0 0.0
        %1477 = vmatprep.subr.mxu0 0.0
        %1478 = vmatpush1.msra.mxu0 0.0
        %1479 = vmatprep.subr.mxu0 0.0
        %1480 = vmatpush1.msra.mxu0 0.0
        %1481 = vmatprep.subr.mxu0 0.0
        %1482 = vmatpush1.msra.mxu0 0.0
        %1483 = vmatprep.subr.mxu0 0.0
        %1484 = vmatpush1.msra.mxu0 0.0
        %1485 = vmatprep.subr.mxu0 0.0
        %1486 = vmatpush1.msra.mxu0 0.0
        %1487 = vmatprep.subr.mxu0 0.0
        %1488 = vmatpush1.msra.mxu0 0.0
        %1489 = vmatprep.subr.mxu0 0.0
        %1490 = vmatpush1.msra.mxu0 0.0
        %1491 = vmatprep.subr.mxu0 0.0
        %1492 = vmatpush1.msra.mxu0 0.0
        %1493 = vmatprep.subr.mxu0 0.0
        %1494 = vmatpush1.msra.mxu0 0.0
        %1495 = vmatprep.subr.mxu0 0.0
        %1496 = vmatpush1.msra.mxu0 0.0
        %1497 = vmatprep.subr.mxu0 0.0
        %1498 = vmatpush1.msra.mxu0 0.0
        %1499 = vmatprep.subr.mxu0 0.0
        %1500 = vmatpush1.msra.mxu0 0.0
        %1501 = vmatprep.subr.mxu0 0.0
        %1502 = vmatpush1.msra.mxu0 0.0
        %1503 = vmatprep.subr.mxu0 0.0
        %1504 = vmatpush1.msra.mxu0 0.0
        %1505 = vmatprep.subr.mxu0 0.0
        %1506 = vmatpush1.msra.mxu0 0.0
        %1507 = vmatprep.subr.mxu0 0.0
        %1508 = vmatpush1.msra.mxu0 0.0
        %1509 = vmatprep.subr.mxu0 0.0
        %1510 = vmatpush1.msra.mxu0 0.0
        %1511 = vmatprep.subr.mxu0 0.0
        %1512 = vmatpush1.msra.mxu0 0.0
        %1513 = vmatprep.subr.mxu0 0.0
        %1514 = vmatpush1.msra.mxu0 0.0
        %1515 = vmatprep.subr.mxu0 0.0
        %1516 = vmatpush1.msra.mxu0 0.0
        %1517 = vmatprep.subr.mxu0 0.0
        %1518 = vmatpush1.msra.mxu0 0.0
        %1519 = vmatprep.subr.mxu0 0.0
        %1520 = vmatpush1.msra.mxu0 0.0
        %1521 = vmatprep.subr.mxu0 0.0
        %1522 = vmatpush1.msra.mxu0 0.0
        %1523 = vmatprep.subr.mxu0 0.0
        %1524 = vmatpush1.msra.mxu0 0.0
        %1525 = vmatprep.mubr.f32.mxu0 0.0
        %1526 = vmatmul.mubr.f32.gmra.mrb[0].mxu0 %v1456
        %v1527 = vpop.f32.mrb[0].mxu0
        %v1528 = vadd.f32 0.0, %v1527
        %v1529 = vpop.f32.mrb[0].mxu0
        %1530 = vmatprep.mubr.f32.mxu0 0.0
        %1531 = vmatmul.mubr.f32.gmra.mrb[0].mxu0 %v1459
        %v1532 = vpop.f32.mrb[0].mxu0
        %v1533 = vadd.f32 0.0, %v1532
        %v1534 = vpop.f32.mrb[0].mxu0
        %1535 = vdwg.mxu0
        %v1537 = vsel %vm1204, %v1291, 0
        %v1540 = vsel %vm1204, %v1292, 0
        %1542 = vmatprep.subr.mxu0 0.0
        %1543 = vmatpush1.msra.mxu0 %v847
        %1544 = vmatprep.subr.mxu0 0.0
        %1545 = vmatpush1.msra.mxu0 %v849
        %1546 = vmatprep.subr.mxu0 0.0
        %1547 = vmatpush1.msra.mxu0 0.0
        %1548 = vmatprep.subr.mxu0 0.0
        %1549 = vmatpush1.msra.mxu0 0.0
        %1550 = vmatprep.subr.mxu0 0.0
        %1551 = vmatpush1.msra.mxu0 0.0
        %1552 = vmatprep.subr.mxu0 0.0
        %1553 = vmatpush1.msra.mxu0 0.0
        %1554 = vmatprep.subr.mxu0 0.0
        %1555 = vmatpush1.msra.mxu0 0.0
        %1556 = vmatprep.subr.mxu0 0.0
        %1557 = vmatpush1.msra.mxu0 0.0
        %1558 = vmatprep.subr.mxu0 0.0
        %1559 = vmatpush1.msra.mxu0 0.0
        %1560 = vmatprep.subr.mxu0 0.0
        %1561 = vmatpush1.msra.mxu0 0.0
        %1562 = vmatprep.subr.mxu0 0.0
        %1563 = vmatpush1.msra.mxu0 0.0
        %1564 = vmatprep.subr.mxu0 0.0
        %1565 = vmatpush1.msra.mxu0 0.0
        %1566 = vmatprep.subr.mxu0 0.0
        %1567 = vmatpush1.msra.mxu0 0.0
        %1568 = vmatprep.subr.mxu0 0.0
        %1569 = vmatpush1.msra.mxu0 0.0
        %1570 = vmatprep.subr.mxu0 0.0
        %1571 = vmatpush1.msra.mxu0 0.0
        %1572 = vmatprep.subr.mxu0 0.0
        %1573 = vmatpush1.msra.mxu0 0.0
        %1574 = vmatprep.subr.mxu0 0.0
        %1575 = vmatpush1.msra.mxu0 0.0
        %1576 = vmatprep.subr.mxu0 0.0
        %1577 = vmatpush1.msra.mxu0 0.0
        %1578 = vmatprep.subr.mxu0 0.0
        %1579 = vmatpush1.msra.mxu0 0.0
        %1580 = vmatprep.subr.mxu0 0.0
        %1581 = vmatpush1.msra.mxu0 0.0
        %1582 = vmatprep.subr.mxu0 0.0
        %1583 = vmatpush1.msra.mxu0 0.0
        %1584 = vmatprep.subr.mxu0 0.0
        %1585 = vmatpush1.msra.mxu0 0.0
        %1586 = vmatprep.subr.mxu0 0.0
        %1587 = vmatpush1.msra.mxu0 0.0
        %1588 = vmatprep.subr.mxu0 0.0
        %1589 = vmatpush1.msra.mxu0 0.0
        %1590 = vmatprep.subr.mxu0 0.0
        %1591 = vmatpush1.msra.mxu0 0.0
        %1592 = vmatprep.subr.mxu0 0.0
        %1593 = vmatpush1.msra.mxu0 0.0
        %1594 = vmatprep.subr.mxu0 0.0
        %1595 = vmatpush1.msra.mxu0 0.0
        %1596 = vmatprep.subr.mxu0 0.0
        %1597 = vmatpush1.msra.mxu0 0.0
        %1598 = vmatprep.subr.mxu0 0.0
        %1599 = vmatpush1.msra.mxu0 0.0
        %1600 = vmatprep.subr.mxu0 0.0
        %1601 = vmatpush1.msra.mxu0 0.0
        %1602 = vmatprep.subr.mxu0 0.0
        %1603 = vmatpush1.msra.mxu0 0.0
        %1604 = vmatprep.subr.mxu0 0.0
        %1605 = vmatpush1.msra.mxu0 0.0
        %1606 = vmatprep.mubr.f32.mxu0 0.0
        %1607 = vmatmul.mubr.f32.gmra.mrb[0].mxu0 %v1537
        %v1608 = vpop.f32.mrb[0].mxu0
        %v1609 = vadd.f32 0.0, %v1608
        %v1610 = vpop.f32.mrb[0].mxu0
        %1611 = vmatprep.mubr.f32.mxu0 0.0
        %1612 = vmatmul.mubr.f32.gmra.mrb[0].mxu0 %v1540
        %v1613 = vpop.f32.mrb[0].mxu0
        %v1614 = vadd.f32 0.0, %v1613
        %v1615 = vpop.f32.mrb[0].mxu0
        %1616 = vdwg.mxu0
        %v1617 = vld [vmem:[#allocation10] sm:$0xff]
        %v1618 = vld [vmem:[#allocation10 + $0x8] sm:$0xff]
        %v1619 = vld [vmem:[#allocation10 + $0x10] sm:$0xff]
        %v1620 = vld [vmem:[#allocation10 + $0x18] sm:$0xff]
        %v1621 = vld [vmem:[#allocation10 + $0x20] sm:$0xff]
        %v1622 = vld [vmem:[#allocation10 + $0x28] sm:$0xff]
        %v1623 = vld [vmem:[#allocation10 + $0x30] sm:$0xff]
        %v1624 = vld [vmem:[#allocation10 + $0x38] sm:$0xff]
        %v1625 = vld [vmem:[#allocation10 + $0x40] sm:$0xff]
        %v1626 = vld [vmem:[#allocation10 + $0x48] sm:$0xff]
        %v1627 = vld [vmem:[#allocation10 + $0x50] sm:$0xff]
        %v1628 = vld [vmem:[#allocation10 + $0x58] sm:$0xff]
        %v1629 = vld [vmem:[#allocation10 + $0x60] sm:$0xff]
        %v1630 = vld [vmem:[#allocation10 + $0x68] sm:$0xff]
        %v1631 = vld [vmem:[#allocation10 + $0x70] sm:$0xff]
        %v1632 = vld [vmem:[#allocation10 + $0x78] sm:$0xff]
        %v1634 = vsel %vm859, %v1366, 0
        %v1637 = vsel %vm859, %v1371, 0
        %1639 = vmatprep.subr.mxu0 0.0
        %1640 = vmatpush1.msra.mxu0 %v1617
        %1641 = vmatprep.subr.mxu0 0.0
        %1642 = vmatpush1.msra.mxu0 %v1618
        %1643 = vmatprep.subr.mxu0 0.0
        %1644 = vmatpush1.msra.mxu0 %v1619
        %1645 = vmatprep.subr.mxu0 0.0
        %1646 = vmatpush1.msra.mxu0 %v1620
        %1647 = vmatprep.subr.mxu0 0.0
        %1648 = vmatpush1.msra.mxu0 0.0
        %1649 = vmatprep.subr.mxu0 0.0
        %1650 = vmatpush1.msra.mxu0 0.0
        %1651 = vmatprep.subr.mxu0 0.0
        %1652 = vmatpush1.msra.mxu0 0.0
        %1653 = vmatprep.subr.mxu0 0.0
        %1654 = vmatpush1.msra.mxu0 0.0
        %1655 = vmatprep.subr.mxu0 0.0
        %1656 = vmatpush1.msra.mxu0 0.0
        %1657 = vmatprep.subr.mxu0 0.0
        %1658 = vmatpush1.msra.mxu0 0.0
        %1659 = vmatprep.subr.mxu0 0.0
        %1660 = vmatpush1.msra.mxu0 0.0
        %1661 = vmatprep.subr.mxu0 0.0
        %1662 = vmatpush1.msra.mxu0 0.0
        %1663 = vmatprep.subr.mxu0 0.0
        %1664 = vmatpush1.msra.mxu0 0.0
        %1665 = vmatprep.subr.mxu0 0.0
        %1666 = vmatpush1.msra.mxu0 0.0
        %1667 = vmatprep.subr.mxu0 0.0
        %1668 = vmatpush1.msra.mxu0 0.0
        %1669 = vmatprep.subr.mxu0 0.0
        %1670 = vmatpush1.msra.mxu0 0.0
        %1671 = vmatprep.subr.mxu0 0.0
        %1672 = vmatpush1.msra.mxu0 0.0
        %1673 = vmatprep.subr.mxu0 0.0
        %1674 = vmatpush1.msra.mxu0 0.0
        %1675 = vmatprep.subr.mxu0 0.0
        %1676 = vmatpush1.msra.mxu0 0.0
        %1677 = vmatprep.subr.mxu0 0.0
        %1678 = vmatpush1.msra.mxu0 0.0
        %1679 = vmatprep.subr.mxu0 0.0
        %1680 = vmatpush1.msra.mxu0 0.0
        %1681 = vmatprep.subr.mxu0 0.0
        %1682 = vmatpush1.msra.mxu0 0.0
        %1683 = vmatprep.subr.mxu0 0.0
        %1684 = vmatpush1.msra.mxu0 0.0
        %1685 = vmatprep.subr.mxu0 0.0
        %1686 = vmatpush1.msra.mxu0 0.0
        %1687 = vmatprep.subr.mxu0 0.0
        %1688 = vmatpush1.msra.mxu0 0.0
        %1689 = vmatprep.subr.mxu0 0.0
        %1690 = vmatpush1.msra.mxu0 0.0
        %1691 = vmatprep.subr.mxu0 0.0
        %1692 = vmatpush1.msra.mxu0 0.0
        %1693 = vmatprep.subr.mxu0 0.0
        %1694 = vmatpush1.msra.mxu0 0.0
        %1695 = vmatprep.subr.mxu0 0.0
        %1696 = vmatpush1.msra.mxu0 0.0
        %1697 = vmatprep.subr.mxu0 0.0
        %1698 = vmatpush1.msra.mxu0 0.0
        %1699 = vmatprep.subr.mxu0 0.0
        %1700 = vmatpush1.msra.mxu0 0.0
        %1701 = vmatprep.subr.mxu0 0.0
        %1702 = vmatpush1.msra.mxu0 0.0
        %1703 = vmatprep.mubr.f32.mxu0 0.0
        %1704 = vmatmul.mubr.f32.gmra.mrb[0].mxu0 %v1634
        %v1705 = vpop.f32.mrb[0].mxu0
        %v1706 = vadd.f32 0.0, %v1705
        %v1707 = vpop.f32.mrb[0].mxu0
        %1708 = vmatprep.mubr.f32.mxu0 0.0
        %1709 = vmatmul.mubr.f32.gmra.mrb[0].mxu0 %v1637
        %v1710 = vpop.f32.mrb[0].mxu0
        %v1711 = vadd.f32 0.0, %v1710
        %v1712 = vpop.f32.mrb[0].mxu0
        %1713 = vdwg.mxu0
        %v1715 = vsel %vm859, %v1447, 0
        %v1718 = vsel %vm859, %v1452, 0
        %1720 = vmatprep.subr.mxu0 0.0
        %1721 = vmatpush1.msra.mxu0 %v1621
        %1722 = vmatprep.subr.mxu0 0.0
        %1723 = vmatpush1.msra.mxu0 %v1622
        %1724 = vmatprep.subr.mxu0 0.0
        %1725 = vmatpush1.msra.mxu0 %v1623
        %1726 = vmatprep.subr.mxu0 0.0
        %1727 = vmatpush1.msra.mxu0 %v1624
        %1728 = vmatprep.subr.mxu0 0.0
        %1729 = vmatpush1.msra.mxu0 0.0
        %1730 = vmatprep.subr.mxu0 0.0
        %1731 = vmatpush1.msra.mxu0 0.0
        %1732 = vmatprep.subr.mxu0 0.0
        %1733 = vmatpush1.msra.mxu0 0.0
        %1734 = vmatprep.subr.mxu0 0.0
        %1735 = vmatpush1.msra.mxu0 0.0
        %1736 = vmatprep.subr.mxu0 0.0
        %1737 = vmatpush1.msra.mxu0 0.0
        %1738 = vmatprep.subr.mxu0 0.0
        %1739 = vmatpush1.msra.mxu0 0.0
        %1740 = vmatprep.subr.mxu0 0.0
        %1741 = vmatpush1.msra.mxu0 0.0
        %1742 = vmatprep.subr.mxu0 0.0
        %1743 = vmatpush1.msra.mxu0 0.0
        %1744 = vmatprep.subr.mxu0 0.0
        %1745 = vmatpush1.msra.mxu0 0.0
        %1746 = vmatprep.subr.mxu0 0.0
        %1747 = vmatpush1.msra.mxu0 0.0
        %1748 = vmatprep.subr.mxu0 0.0
        %1749 = vmatpush1.msra.mxu0 0.0
        %1750 = vmatprep.subr.mxu0 0.0
        %1751 = vmatpush1.msra.mxu0 0.0
        %1752 = vmatprep.subr.mxu0 0.0
        %1753 = vmatpush1.msra.mxu0 0.0
        %1754 = vmatprep.subr.mxu0 0.0
        %1755 = vmatpush1.msra.mxu0 0.0
        %1756 = vmatprep.subr.mxu0 0.0
        %1757 = vmatpush1.msra.mxu0 0.0
        %1758 = vmatprep.subr.mxu0 0.0
        %1759 = vmatpush1.msra.mxu0 0.0
        %1760 = vmatprep.subr.mxu0 0.0
        %1761 = vmatpush1.msra.mxu0 0.0
        %1762 = vmatprep.subr.mxu0 0.0
        %1763 = vmatpush1.msra.mxu0 0.0
        %1764 = vmatprep.subr.mxu0 0.0
        %1765 = vmatpush1.msra.mxu0 0.0
        %1766 = vmatprep.subr.mxu0 0.0
        %1767 = vmatpush1.msra.mxu0 0.0
        %1768 = vmatprep.subr.mxu0 0.0
        %1769 = vmatpush1.msra.mxu0 0.0
        %1770 = vmatprep.subr.mxu0 0.0
        %1771 = vmatpush1.msra.mxu0 0.0
        %1772 = vmatprep.subr.mxu0 0.0
        %1773 = vmatpush1.msra.mxu0 0.0
        %1774 = vmatprep.subr.mxu0 0.0
        %1775 = vmatpush1.msra.mxu0 0.0
        %1776 = vmatprep.subr.mxu0 0.0
        %1777 = vmatpush1.msra.mxu0 0.0
        %1778 = vmatprep.subr.mxu0 0.0
        %1779 = vmatpush1.msra.mxu0 0.0
        %1780 = vmatprep.subr.mxu0 0.0
        %1781 = vmatpush1.msra.mxu0 0.0
        %1782 = vmatprep.subr.mxu0 0.0
        %1783 = vmatpush1.msra.mxu0 0.0
        %1784 = vmatprep.mubr.f32.mxu0 0.0
        %1785 = vmatmul.mubr.f32.gmra.mrb[0].mxu0 %v1715
        %v1786 = vpop.f32.mrb[0].mxu0
        %v1787 = vadd.f32 0.0, %v1786
        %v1788 = vpop.f32.mrb[0].mxu0
        %1789 = vmatprep.mubr.f32.mxu0 0.0
        %1790 = vmatmul.mubr.f32.gmra.mrb[0].mxu0 %v1718
        %v1791 = vpop.f32.mrb[0].mxu0
        %v1792 = vadd.f32 0.0, %v1791
        %v1793 = vpop.f32.mrb[0].mxu0
        %1794 = vdwg.mxu0
        %v1796 = vsel %vm859, %v1528, 0
        %v1799 = vsel %vm859, %v1533, 0
        %1801 = vmatprep.subr.mxu0 0.0
        %1802 = vmatpush1.msra.mxu0 %v1625
        %1803 = vmatprep.subr.mxu0 0.0
        %1804 = vmatpush1.msra.mxu0 %v1626
        %1805 = vmatprep.subr.mxu0 0.0
        %1806 = vmatpush1.msra.mxu0 %v1627
        %1807 = vmatprep.subr.mxu0 0.0
        %1808 = vmatpush1.msra.mxu0 %v1628
        %1809 = vmatprep.subr.mxu0 0.0
        %1810 = vmatpush1.msra.mxu0 0.0
        %1811 = vmatprep.subr.mxu0 0.0
        %1812 = vmatpush1.msra.mxu0 0.0
        %1813 = vmatprep.subr.mxu0 0.0
        %1814 = vmatpush1.msra.mxu0 0.0
        %1815 = vmatprep.subr.mxu0 0.0
        %1816 = vmatpush1.msra.mxu0 0.0
        %1817 = vmatprep.subr.mxu0 0.0
        %1818 = vmatpush1.msra.mxu0 0.0
        %1819 = vmatprep.subr.mxu0 0.0
        %1820 = vmatpush1.msra.mxu0 0.0
        %1821 = vmatprep.subr.mxu0 0.0
        %1822 = vmatpush1.msra.mxu0 0.0
        %1823 = vmatprep.subr.mxu0 0.0
        %1824 = vmatpush1.msra.mxu0 0.0
        %1825 = vmatprep.subr.mxu0 0.0
        %1826 = vmatpush1.msra.mxu0 0.0
        %1827 = vmatprep.subr.mxu0 0.0
        %1828 = vmatpush1.msra.mxu0 0.0
        %1829 = vmatprep.subr.mxu0 0.0
        %1830 = vmatpush1.msra.mxu0 0.0
        %1831 = vmatprep.subr.mxu0 0.0
        %1832 = vmatpush1.msra.mxu0 0.0
        %1833 = vmatprep.subr.mxu0 0.0
        %1834 = vmatpush1.msra.mxu0 0.0
        %1835 = vmatprep.subr.mxu0 0.0
        %1836 = vmatpush1.msra.mxu0 0.0
        %1837 = vmatprep.subr.mxu0 0.0
        %1838 = vmatpush1.msra.mxu0 0.0
        %1839 = vmatprep.subr.mxu0 0.0
        %1840 = vmatpush1.msra.mxu0 0.0
        %1841 = vmatprep.subr.mxu0 0.0
        %1842 = vmatpush1.msra.mxu0 0.0
        %1843 = vmatprep.subr.mxu0 0.0
        %1844 = vmatpush1.msra.mxu0 0.0
        %1845 = vmatprep.subr.mxu0 0.0
        %1846 = vmatpush1.msra.mxu0 0.0
        %1847 = vmatprep.subr.mxu0 0.0
        %1848 = vmatpush1.msra.mxu0 0.0
        %1849 = vmatprep.subr.mxu0 0.0
        %1850 = vmatpush1.msra.mxu0 0.0
        %1851 = vmatprep.subr.mxu0 0.0
        %1852 = vmatpush1.msra.mxu0 0.0
        %1853 = vmatprep.subr.mxu0 0.0
        %1854 = vmatpush1.msra.mxu0 0.0
        %1855 = vmatprep.subr.mxu0 0.0
        %1856 = vmatpush1.msra.mxu0 0.0
        %1857 = vmatprep.subr.mxu0 0.0
        %1858 = vmatpush1.msra.mxu0 0.0
        %1859 = vmatprep.subr.mxu0 0.0
        %1860 = vmatpush1.msra.mxu0 0.0
        %1861 = vmatprep.subr.mxu0 0.0
        %1862 = vmatpush1.msra.mxu0 0.0
        %1863 = vmatprep.subr.mxu0 0.0
        %1864 = vmatpush1.msra.mxu0 0.0
        %1865 = vmatprep.mubr.f32.mxu0 0.0
        %1866 = vmatmul.mubr.f32.gmra.mrb[0].mxu0 %v1796
        %v1867 = vpop.f32.mrb[0].mxu0
        %v1868 = vadd.f32 0.0, %v1867
        %v1869 = vpop.f32.mrb[0].mxu0
        %1870 = vmatprep.mubr.f32.mxu0 0.0
        %1871 = vmatmul.mubr.f32.gmra.mrb[0].mxu0 %v1799
        %v1872 = vpop.f32.mrb[0].mxu0
        %v1873 = vadd.f32 0.0, %v1872
        %v1874 = vpop.f32.mrb[0].mxu0
        %1875 = vdwg.mxu0
        %v1877 = vsel %vm859, %v1609, 0
        %v1880 = vsel %vm859, %v1614, 0
        %1882 = vmatprep.subr.mxu0 0.0
        %1883 = vmatpush1.msra.mxu0 %v1629
        %1884 = vmatprep.subr.mxu0 0.0
        %1885 = vmatpush1.msra.mxu0 %v1630
        %1886 = vmatprep.subr.mxu0 0.0
        %1887 = vmatpush1.msra.mxu0 %v1631
        %1888 = vmatprep.subr.mxu0 0.0
        %1889 = vmatpush1.msra.mxu0 %v1632
        %1890 = vmatprep.subr.mxu0 0.0
        %1891 = vmatpush1.msra.mxu0 0.0
        %1892 = vmatprep.subr.mxu0 0.0
        %1893 = vmatpush1.msra.mxu0 0.0
        %1894 = vmatprep.subr.mxu0 0.0
        %1895 = vmatpush1.msra.mxu0 0.0
        %1896 = vmatprep.subr.mxu0 0.0
        %1897 = vmatpush1.msra.mxu0 0.0
        %1898 = vmatprep.subr.mxu0 0.0
        %1899 = vmatpush1.msra.mxu0 0.0
        %1900 = vmatprep.subr.mxu0 0.0
        %1901 = vmatpush1.msra.mxu0 0.0
        %1902 = vmatprep.subr.mxu0 0.0
        %1903 = vmatpush1.msra.mxu0 0.0
        %1904 = vmatprep.subr.mxu0 0.0
        %1905 = vmatpush1.msra.mxu0 0.0
        %1906 = vmatprep.subr.mxu0 0.0
        %1907 = vmatpush1.msra.mxu0 0.0
        %1908 = vmatprep.subr.mxu0 0.0
        %1909 = vmatpush1.msra.mxu0 0.0
        %1910 = vmatprep.subr.mxu0 0.0
        %1911 = vmatpush1.msra.mxu0 0.0
        %1912 = vmatprep.subr.mxu0 0.0
        %1913 = vmatpush1.msra.mxu0 0.0
        %1914 = vmatprep.subr.mxu0 0.0
        %1915 = vmatpush1.msra.mxu0 0.0
        %1916 = vmatprep.subr.mxu0 0.0
        %1917 = vmatpush1.msra.mxu0 0.0
        %1918 = vmatprep.subr.mxu0 0.0
        %1919 = vmatpush1.msra.mxu0 0.0
        %1920 = vmatprep.subr.mxu0 0.0
        %1921 = vmatpush1.msra.mxu0 0.0
        %1922 = vmatprep.subr.mxu0 0.0
        %1923 = vmatpush1.msra.mxu0 0.0
        %1924 = vmatprep.subr.mxu0 0.0
        %1925 = vmatpush1.msra.mxu0 0.0
        %1926 = vmatprep.subr.mxu0 0.0
        %1927 = vmatpush1.msra.mxu0 0.0
        %1928 = vmatprep.subr.mxu0 0.0
        %1929 = vmatpush1.msra.mxu0 0.0
        %1930 = vmatprep.subr.mxu0 0.0
        %1931 = vmatpush1.msra.mxu0 0.0
        %1932 = vmatprep.subr.mxu0 0.0
        %1933 = vmatpush1.msra.mxu0 0.0
        %1934 = vmatprep.subr.mxu0 0.0
        %1935 = vmatpush1.msra.mxu0 0.0
        %1936 = vmatprep.subr.mxu0 0.0
        %1937 = vmatpush1.msra.mxu0 0.0
        %1938 = vmatprep.subr.mxu0 0.0
        %1939 = vmatpush1.msra.mxu0 0.0
        %1940 = vmatprep.subr.mxu0 0.0
        %1941 = vmatpush1.msra.mxu0 0.0
        %1942 = vmatprep.subr.mxu0 0.0
        %1943 = vmatpush1.msra.mxu0 0.0
        %1944 = vmatprep.subr.mxu0 0.0
        %1945 = vmatpush1.msra.mxu0 0.0
        %1946 = vmatprep.mubr.f32.mxu0 0.0
        %1947 = vmatmul.mubr.f32.gmra.mrb[0].mxu0 %v1877
        %v1948 = vpop.f32.mrb[0].mxu0
        %v1949 = vadd.f32 0.0, %v1948
        %v1950 = vpop.f32.mrb[0].mxu0
        %1951 = vmatprep.mubr.f32.mxu0 0.0
        %1952 = vmatmul.mubr.f32.gmra.mrb[0].mxu0 %v1880
        %v1953 = vpop.f32.mrb[0].mxu0
        %v1954 = vadd.f32 0.0, %v1953
        %v1955 = vpop.f32.mrb[0].mxu0
        %1956 = vdwg.mxu0
        %v1957 = vadd.f32 %v1706, %v1787
        %v1958 = vadd.f32 %v1957, %v1868
        %v1959 = vadd.f32 %v1958, %v1949
        %v1960 = vadd.f32 %v1711, %v1792
        %v1961 = vadd.f32 %v1960, %v1873
        %v1962 = vadd.f32 %v1961, %v1954
        %v1963 = vadd.f32 %v542, %v1959
        %v1964 = vadd.f32 %v543, %v1962
        %v1965 = vld [vmem:[%s6] sm:$0x1]
        %v1967 = vlaneseq
        %v1968 = vshrl.u32 %v1967, 7
        %v1969 = vsub.s32 0, %v1968
        %v1970 = vrot.slane %v1965, %v1969
        %v1972 = vadd.f32 %v1963, %v1970
        %v1973 = vadd.f32 %v1964, %v1970
        %v1974 = vld [vmem:[%s7] sm:$0x1]
        %v1975 = vld [vmem:[%s8] sm:$0x1]
        %1976 = vadd.xlane.f32.xlu0 %v1972
        %v1977 = vpop.xlane.xlu0 %1976
        %1978 = vadd.xlane.f32.xlu0 %v1973
        %v1979 = vpop.xlane.xlu0 %1978
        %v1980 = vmul.f32 %v1977, %v550
        %v1981 = vmul.f32 %v1979, %v550
        %v1982 = vsub.f32 %v1972, %v1980
        %v1983 = vsub.f32 %v1973, %v1981
        %v1984 = vmul.f32 %v1982, %v1982
        %v1985 = vmul.f32 %v1983, %v1983
        %1986 = vadd.xlane.f32.xlu0 %v1984
        %v1987 = vpop.xlane.xlu0 %1986
        %1988 = vadd.xlane.f32.xlu0 %v1985
        %v1989 = vpop.xlane.xlu0 %1988
        %v1990 = vmul.f32 %v1987, %v550
        %v1991 = vmul.f32 %v1989, %v550
        %v1992 = vadd.f32 %v1990, 1e-05
        %v1993 = vadd.f32 %v1991, 1e-05
        %v1994 = vrsqrt.pop %v1992
        %v1995 = vrsqrt.pop %v1993
        %v1996 = vmul.f32 %v1982, %v1994
        %v1997 = vmul.f32 %v1983, %v1995
        %v1999 = vlaneseq
        %v2000 = vshrl.u32 %v1999, 7
        %v2001 = vsub.s32 0, %v2000
        %v2002 = vrot.slane %v1974, %v2001
        %v2004 = vmul.f32 %v1996, %v2002
        %v2005 = vmul.f32 %v1997, %v2002
        %v2007 = vlaneseq
        %v2008 = vshrl.u32 %v2007, 7
        %v2009 = vsub.s32 0, %v2008
        %v2010 = vrot.slane %v1975, %v2009
        %v2012 = vadd.f32 %v2004, %v2010
        %v2013 = vadd.f32 %v2005, %v2010
        %v2014 = vld [vmem:[#allocation11] sm:$0xff]
        %v2015 = vld [vmem:[#allocation11 + $0x8] sm:$0xff]
        %v2016 = vld [vmem:[#allocation11 + $0x10] sm:$0xff]
        %v2017 = vld [vmem:[#allocation11 + $0x18] sm:$0xff]
        %v2018 = vld [vmem:[#allocation11 + $0x20] sm:$0xff]
        %v2019 = vld [vmem:[#allocation11 + $0x28] sm:$0xff]
        %v2020 = vld [vmem:[#allocation11 + $0x30] sm:$0xff]
        %v2021 = vld [vmem:[#allocation11 + $0x38] sm:$0xff]
        %v2022 = vld [vmem:[#allocation11 + $0x40] sm:$0xff]
        %v2023 = vld [vmem:[#allocation11 + $0x48] sm:$0xff]
        %v2024 = vld [vmem:[#allocation11 + $0x50] sm:$0xff]
        %v2025 = vld [vmem:[#allocation11 + $0x58] sm:$0xff]
        %v2026 = vld [vmem:[#allocation11 + $0x60] sm:$0xff]
        %v2027 = vld [vmem:[#allocation11 + $0x68] sm:$0xff]
        %v2028 = vld [vmem:[#allocation11 + $0x70] sm:$0xff]
        %v2029 = vld [vmem:[#allocation11 + $0x78] sm:$0xff]
        %v2030 = vld [vmem:[#allocation11 + $0x80] sm:$0xff]
        %v2031 = vld [vmem:[#allocation11 + $0x88] sm:$0xff]
        %v2032 = vld [vmem:[#allocation11 + $0x90] sm:$0xff]
        %v2033 = vld [vmem:[#allocation11 + $0x98] sm:$0xff]
        %v2034 = vld [vmem:[#allocation11 + $0xa0] sm:$0xff]
        %v2035 = vld [vmem:[#allocation11 + $0xa8] sm:$0xff]
        %v2036 = vld [vmem:[#allocation11 + $0xb0] sm:$0xff]
        %v2037 = vld [vmem:[#allocation11 + $0xb8] sm:$0xff]
        %v2038 = vld [vmem:[#allocation11 + $0xc0] sm:$0xff]
        %v2039 = vld [vmem:[#allocation11 + $0xc8] sm:$0xff]
        %v2040 = vld [vmem:[#allocation11 + $0xd0] sm:$0xff]
        %v2041 = vld [vmem:[#allocation11 + $0xd8] sm:$0xff]
        %v2042 = vld [vmem:[#allocation11 + $0xe0] sm:$0xff]
        %v2043 = vld [vmem:[#allocation11 + $0xe8] sm:$0xff]
        %v2044 = vld [vmem:[#allocation11 + $0xf0] sm:$0xff]
        %v2045 = vld [vmem:[#allocation11 + $0xf8] sm:$0xff]
        %v2046 = vld [vmem:[#allocation11 + $0x100] sm:$0xff]
        %v2047 = vld [vmem:[#allocation11 + $0x108] sm:$0xff]
        %v2048 = vld [vmem:[#allocation11 + $0x110] sm:$0xff]
        %v2049 = vld [vmem:[#allocation11 + $0x118] sm:$0xff]
        %v2050 = vld [vmem:[#allocation11 + $0x120] sm:$0xff]
        %v2051 = vld [vmem:[#allocation11 + $0x128] sm:$0xff]
        %v2052 = vld [vmem:[#allocation11 + $0x130] sm:$0xff]
        %v2053 = vld [vmem:[#allocation11 + $0x138] sm:$0xff]
        %v2054 = vld [vmem:[#allocation11 + $0x140] sm:$0xff]
        %v2055 = vld [vmem:[#allocation11 + $0x148] sm:$0xff]
        %v2056 = vld [vmem:[#allocation11 + $0x150] sm:$0xff]
        %v2057 = vld [vmem:[#allocation11 + $0x158] sm:$0xff]
        %v2058 = vld [vmem:[#allocation11 + $0x160] sm:$0xff]
        %v2059 = vld [vmem:[#allocation11 + $0x168] sm:$0xff]
        %v2060 = vld [vmem:[#allocation11 + $0x170] sm:$0xff]
        %v2061 = vld [vmem:[#allocation11 + $0x178] sm:$0xff]
        %v2062 = vld [vmem:[#allocation11 + $0x180] sm:$0xff]
        %v2063 = vld [vmem:[#allocation11 + $0x188] sm:$0xff]
        %v2064 = vld [vmem:[#allocation11 + $0x190] sm:$0xff]
        %v2065 = vld [vmem:[#allocation11 + $0x198] sm:$0xff]
        %v2066 = vld [vmem:[#allocation11 + $0x1a0] sm:$0xff]
        %v2067 = vld [vmem:[#allocation11 + $0x1a8] sm:$0xff]
        %v2068 = vld [vmem:[#allocation11 + $0x1b0] sm:$0xff]
        %v2069 = vld [vmem:[#allocation11 + $0x1b8] sm:$0xff]
        %v2070 = vld [vmem:[#allocation11 + $0x1c0] sm:$0xff]
        %v2071 = vld [vmem:[#allocation11 + $0x1c8] sm:$0xff]
        %v2072 = vld [vmem:[#allocation11 + $0x1d0] sm:$0xff]
        %v2073 = vld [vmem:[#allocation11 + $0x1d8] sm:$0xff]
        %v2074 = vld [vmem:[#allocation11 + $0x1e0] sm:$0xff]
        %v2075 = vld [vmem:[#allocation11 + $0x1e8] sm:$0xff]
        %v2076 = vld [vmem:[#allocation11 + $0x1f0] sm:$0xff]
        %v2077 = vld [vmem:[#allocation11 + $0x1f8] sm:$0xff]
        %v2078 = vld [vmem:[%s10] sm:$0xf]
        %v2080 = vlaneseq
        %v2081 = vshrl.u32 %v2080, 7
        %v2082 = vsub.s32 0, %v2081
        %v2083 = vrot.slane %v2078, %v2082
        %v2084 = vlaneseq
        %v2085 = vshrl.u32 %v2084, 7
        %v2086 = vsub.s32 1, %v2085
        %v2087 = vrot.slane %v2078, %v2086
        %v2088 = vlaneseq
        %v2089 = vshrl.u32 %v2088, 7
        %v2090 = vsub.s32 2, %v2089
        %v2091 = vrot.slane %v2078, %v2090
        %v2092 = vlaneseq
        %v2093 = vshrl.u32 %v2092, 7
        %v2094 = vsub.s32 3, %v2093
        %v2095 = vrot.slane %v2078, %v2094
        %2100 = vmatprep.subr.mxu0 %v2015
        %2101 = vmatpush1.msra.mxu0 %v2014
        %2102 = vmatprep.subr.mxu0 %v2019
        %2103 = vmatpush1.msra.mxu0 %v2018
        %2104 = vmatprep.subr.mxu0 %v2023
        %2105 = vmatpush1.msra.mxu0 %v2022
        %2106 = vmatprep.subr.mxu0 %v2027
        %2107 = vmatpush1.msra.mxu0 %v2026
        %2108 = vmatprep.subr.mxu0 %v2031
        %2109 = vmatpush1.msra.mxu0 %v2030
        %2110 = vmatprep.subr.mxu0 %v2035
        %2111 = vmatpush1.msra.mxu0 %v2034
        %2112 = vmatprep.subr.mxu0 %v2039
        %2113 = vmatpush1.msra.mxu0 %v2038
        %2114 = vmatprep.subr.mxu0 %v2043
        %2115 = vmatpush1.msra.mxu0 %v2042
        %2116 = vmatprep.subr.mxu0 %v2047
        %2117 = vmatpush1.msra.mxu0 %v2046
        %2118 = vmatprep.subr.mxu0 %v2051
        %2119 = vmatpush1.msra.mxu0 %v2050
        %2120 = vmatprep.subr.mxu0 %v2055
        %2121 = vmatpush1.msra.mxu0 %v2054
        %2122 = vmatprep.subr.mxu0 %v2059
        %2123 = vmatpush1.msra.mxu0 %v2058
        %2124 = vmatprep.subr.mxu0 %v2063
        %2125 = vmatpush1.msra.mxu0 %v2062
        %2126 = vmatprep.subr.mxu0 %v2067
        %2127 = vmatpush1.msra.mxu0 %v2066
        %2128 = vmatprep.subr.mxu0 %v2071
        %2129 = vmatpush1.msra.mxu0 %v2070
        %2130 = vmatprep.subr.mxu0 %v2075
        %2131 = vmatpush1.msra.mxu0 %v2074
        %2132 = vmatprep.subr.mxu0 0.0
        %2133 = vmatpush1.msra.mxu0 0.0
        %2134 = vmatprep.subr.mxu0 0.0
        %2135 = vmatpush1.msra.mxu0 0.0
        %2136 = vmatprep.subr.mxu0 0.0
        %2137 = vmatpush1.msra.mxu0 0.0
        %2138 = vmatprep.subr.mxu0 0.0
        %2139 = vmatpush1.msra.mxu0 0.0
        %2140 = vmatprep.subr.mxu0 0.0
        %2141 = vmatpush1.msra.mxu0 0.0
        %2142 = vmatprep.subr.mxu0 0.0
        %2143 = vmatpush1.msra.mxu0 0.0
        %2144 = vmatprep.subr.mxu0 0.0
        %2145 = vmatpush1.msra.mxu0 0.0
        %2146 = vmatprep.subr.mxu0 0.0
        %2147 = vmatpush1.msra.mxu0 0.0
        %2148 = vmatprep.subr.mxu0 0.0
        %2149 = vmatpush1.msra.mxu0 0.0
        %2150 = vmatprep.subr.mxu0 0.0
        %2151 = vmatpush1.msra.mxu0 0.0
        %2152 = vmatprep.subr.mxu0 0.0
        %2153 = vmatpush1.msra.mxu0 0.0
        %2154 = vmatprep.subr.mxu0 0.0
        %2155 = vmatpush1.msra.mxu0 0.0
        %2156 = vmatprep.subr.mxu0 0.0
        %2157 = vmatpush1.msra.mxu0 0.0
        %2158 = vmatprep.subr.mxu0 0.0
        %2159 = vmatpush1.msra.mxu0 0.0
        %2160 = vmatprep.subr.mxu0 0.0
        %2161 = vmatpush1.msra.mxu0 0.0
        %2162 = vmatprep.subr.mxu0 0.0
        %2163 = vmatpush1.msra.mxu0 0.0
        %2164 = vmatprep.mubr.f32.mxu0 0.0
        %2165 = vmatmul.mubr.f32.gmra.mrb[0].mxu0 %v2012
        %v2166 = vpop.f32.mrb[0].mxu0
        %v2167 = vadd.f32 %v2083, %v2166
        %v2168 = vpop.f32.mrb[0].mxu0
        %v2169 = vadd.f32 %v2087, %v2168
        %2170 = vmatprep.mubr.f32.mxu0 0.0
        %2171 = vmatmul.mubr.f32.gmra.mrb[0].mxu0 %v2013
        %v2172 = vpop.f32.mrb[0].mxu0
        %v2173 = vadd.f32 %v2083, %v2172
        %v2174 = vpop.f32.mrb[0].mxu0
        %v2175 = vadd.f32 %v2087, %v2174
        %2176 = vdwg.mxu0
        %2177 = vmatprep.subr.mxu0 %v2017
        %2178 = vmatpush1.msra.mxu0 %v2016
        %2179 = vmatprep.subr.mxu0 %v2021
        %2180 = vmatpush1.msra.mxu0 %v2020
        %2181 = vmatprep.subr.mxu0 %v2025
        %2182 = vmatpush1.msra.mxu0 %v2024
        %2183 = vmatprep.subr.mxu0 %v2029
        %2184 = vmatpush1.msra.mxu0 %v2028
        %2185 = vmatprep.subr.mxu0 %v2033
        %2186 = vmatpush1.msra.mxu0 %v2032
        %2187 = vmatprep.subr.mxu0 %v2037
        %2188 = vmatpush1.msra.mxu0 %v2036
        %2189 = vmatprep.subr.mxu0 %v2041
        %2190 = vmatpush1.msra.mxu0 %v2040
        %2191 = vmatprep.subr.mxu0 %v2045
        %2192 = vmatpush1.msra.mxu0 %v2044
        %2193 = vmatprep.subr.mxu0 %v2049
        %2194 = vmatpush1.msra.mxu0 %v2048
        %2195 = vmatprep.subr.mxu0 %v2053
        %2196 = vmatpush1.msra.mxu0 %v2052
        %2197 = vmatprep.subr.mxu0 %v2057
        %2198 = vmatpush1.msra.mxu0 %v2056
        %2199 = vmatprep.subr.mxu0 %v2061
        %2200 = vmatpush1.msra.mxu0 %v2060
        %2201 = vmatprep.subr.mxu0 %v2065
        %2202 = vmatpush1.msra.mxu0 %v2064
        %2203 = vmatprep.subr.mxu0 %v2069
        %2204 = vmatpush1.msra.mxu0 %v2068
        %2205 = vmatprep.subr.mxu0 %v2073
        %2206 = vmatpush1.msra.mxu0 %v2072
        %2207 = vmatprep.subr.mxu0 %v2077
        %2208 = vmatpush1.msra.mxu0 %v2076
        %2209 = vmatprep.subr.mxu0 0.0
        %2210 = vmatpush1.msra.mxu0 0.0
        %2211 = vmatprep.subr.mxu0 0.0
        %2212 = vmatpush1.msra.mxu0 0.0
        %2213 = vmatprep.subr.mxu0 0.0
        %2214 = vmatpush1.msra.mxu0 0.0
        %2215 = vmatprep.subr.mxu0 0.0
        %2216 = vmatpush1.msra.mxu0 0.0
        %2217 = vmatprep.subr.mxu0 0.0
        %2218 = vmatpush1.msra.mxu0 0.0
        %2219 = vmatprep.subr.mxu0 0.0
        %2220 = vmatpush1.msra.mxu0 0.0
        %2221 = vmatprep.subr.mxu0 0.0
        %2222 = vmatpush1.msra.mxu0 0.0
        %2223 = vmatprep.subr.mxu0 0.0
        %2224 = vmatpush1.msra.mxu0 0.0
        %2225 = vmatprep.subr.mxu0 0.0
        %2226 = vmatpush1.msra.mxu0 0.0
        %2227 = vmatprep.subr.mxu0 0.0
        %2228 = vmatpush1.msra.mxu0 0.0
        %2229 = vmatprep.subr.mxu0 0.0
        %2230 = vmatpush1.msra.mxu0 0.0
        %2231 = vmatprep.subr.mxu0 0.0
        %2232 = vmatpush1.msra.mxu0 0.0
        %2233 = vmatprep.subr.mxu0 0.0
        %2234 = vmatpush1.msra.mxu0 0.0
        %2235 = vmatprep.subr.mxu0 0.0
        %2236 = vmatpush1.msra.mxu0 0.0
        %2237 = vmatprep.subr.mxu0 0.0
        %2238 = vmatpush1.msra.mxu0 0.0
        %2239 = vmatprep.subr.mxu0 0.0
        %2240 = vmatpush1.msra.mxu0 0.0
        %2241 = vmatprep.mubr.f32.mxu0 0.0
        %2242 = vmatmul.mubr.f32.gmra.mrb[0].mxu0 %v2012
        %v2243 = vpop.f32.mrb[0].mxu0
        %v2244 = vadd.f32 %v2091, %v2243
        %v2245 = vpop.f32.mrb[0].mxu0
        %v2246 = vadd.f32 %v2095, %v2245
        %2247 = vmatprep.mubr.f32.mxu0 0.0
        %2248 = vmatmul.mubr.f32.gmra.mrb[0].mxu0 %v2013
        %v2249 = vpop.f32.mrb[0].mxu0
        %v2250 = vadd.f32 %v2091, %v2249
        %v2251 = vpop.f32.mrb[0].mxu0
        %v2252 = vadd.f32 %v2095, %v2251
        %2253 = vdwg.mxu0
        %v2254 = vmul.f32 %v2167, 0.5
        %v2255 = vmul.f32 %v2169, 0.5
        %v2256 = vmul.f32 %v2244, 0.5
        %v2257 = vmul.f32 %v2246, 0.5
        %v2258 = vmul.f32 %v2173, 0.5
        %v2259 = vmul.f32 %v2175, 0.5
        %v2260 = vmul.f32 %v2250, 0.5
        %v2261 = vmul.f32 %v2252, 0.5
        %v2262 = vmul.f32 %v2167, 0.044715
        %v2263 = vmul.f32 %v2169, 0.044715
        %v2264 = vmul.f32 %v2244, 0.044715
        %v2265 = vmul.f32 %v2246, 0.044715
        %v2266 = vmul.f32 %v2173, 0.044715
        %v2267 = vmul.f32 %v2175, 0.044715
        %v2268 = vmul.f32 %v2250, 0.044715
        %v2269 = vmul.f32 %v2252, 0.044715
        %v2270 = vmul.f32 %v2262, %v2167
        %v2271 = vmul.f32 %v2263, %v2169
        %v2272 = vmul.f32 %v2264, %v2244
        %v2273 = vmul.f32 %v2265, %v2246
        %v2274 = vmul.f32 %v2266, %v2173
        %v2275 = vmul.f32 %v2267, %v2175
        %v2276 = vmul.f32 %v2268, %v2250
        %v2277 = vmul.f32 %v2269, %v2252
        %v2278 = vmul.f32 %v2270, %v2167
        %v2279 = vmul.f32 %v2271, %v2169
        %v2280 = vmul.f32 %v2272, %v2244
        %v2281 = vmul.f32 %v2273, %v2246
        %v2282 = vmul.f32 %v2274, %v2173
        %v2283 = vmul.f32 %v2275, %v2175
        %v2284 = vmul.f32 %v2276, %v2250
        %v2285 = vmul.f32 %v2277, %v2252
        %v2286 = vadd.f32 %v2167, %v2278
        %v2287 = vadd.f32 %v2169, %v2279
        %v2288 = vadd.f32 %v2244, %v2280
        %v2289 = vadd.f32 %v2246, %v2281
        %v2290 = vadd.f32 %v2173, %v2282
        %v2291 = vadd.f32 %v2175, %v2283
        %v2292 = vadd.f32 %v2250, %v2284
        %v2293 = vadd.f32 %v2252, %v2285
        %v2294 = vmul.f32 %v2286, 0.7978846
        %v2295 = vmul.f32 %v2287, 0.7978846
        %v2296 = vmul.f32 %v2288, 0.7978846
        %v2297 = vmul.f32 %v2289, 0.7978846
        %v2298 = vmul.f32 %v2290, 0.7978846
        %v2299 = vmul.f32 %v2291, 0.7978846
        %v2300 = vmul.f32 %v2292, 0.7978846
        %v2301 = vmul.f32 %v2293, 0.7978846
        %v2302 = vtanh.pop %v2294
        %v2303 = vtanh.pop %v2295
        %v2304 = vtanh.pop %v2296
        %v2305 = vtanh.pop %v2297
        %v2306 = vtanh.pop %v2298
        %v2307 = vtanh.pop %v2299
        %v2308 = vtanh.pop %v2300
        %v2309 = vtanh.pop %v2301
        %v2310 = vadd.f32 %v2302, 1.0
        %v2311 = vadd.f32 %v2303, 1.0
        %v2312 = vadd.f32 %v2304, 1.0
        %v2313 = vadd.f32 %v2305, 1.0
        %v2314 = vadd.f32 %v2306, 1.0
        %v2315 = vadd.f32 %v2307, 1.0
        %v2316 = vadd.f32 %v2308, 1.0
        %v2317 = vadd.f32 %v2309, 1.0
        %v2318 = vmul.f32 %v2254, %v2310
        %v2319 = vmul.f32 %v2255, %v2311
        %v2320 = vmul.f32 %v2256, %v2312
        %v2321 = vmul.f32 %v2257, %v2313
        %v2322 = vmul.f32 %v2258, %v2314
        %v2323 = vmul.f32 %v2259, %v2315
        %v2324 = vmul.f32 %v2260, %v2316
        %v2325 = vmul.f32 %v2261, %v2317
        %v2326 = vld [vmem:[#allocation13] sm:$0xff]
        %v2327 = vld [vmem:[#allocation13 + $0x8] sm:$0xff]
        %v2328 = vld [vmem:[#allocation13 + $0x10] sm:$0xff]
        %v2329 = vld [vmem:[#allocation13 + $0x18] sm:$0xff]
        %v2330 = vld [vmem:[#allocation13 + $0x20] sm:$0xff]
        %v2331 = vld [vmem:[#allocation13 + $0x28] sm:$0xff]
        %v2332 = vld [vmem:[#allocation13 + $0x30] sm:$0xff]
        %v2333 = vld [vmem:[#allocation13 + $0x38] sm:$0xff]
        %v2334 = vld [vmem:[#allocation13 + $0x40] sm:$0xff]
        %v2335 = vld [vmem:[#allocation13 + $0x48] sm:$0xff]
        %v2336 = vld [vmem:[#allocation13 + $0x50] sm:$0xff]
        %v2337 = vld [vmem:[#allocation13 + $0x58] sm:$0xff]
        %v2338 = vld [vmem:[#allocation13 + $0x60] sm:$0xff]
        %v2339 = vld [vmem:[#allocation13 + $0x68] sm:$0xff]
        %v2340 = vld [vmem:[#allocation13 + $0x70] sm:$0xff]
        %v2341 = vld [vmem:[#allocation13 + $0x78] sm:$0xff]
        %v2342 = vld [vmem:[#allocation13 + $0x80] sm:$0xff]
        %v2343 = vld [vmem:[#allocation13 + $0x88] sm:$0xff]
        %v2344 = vld [vmem:[#allocation13 + $0x90] sm:$0xff]
        %v2345 = vld [vmem:[#allocation13 + $0x98] sm:$0xff]
        %v2346 = vld [vmem:[#allocation13 + $0xa0] sm:$0xff]
        %v2347 = vld [vmem:[#allocation13 + $0xa8] sm:$0xff]
        %v2348 = vld [vmem:[#allocation13 + $0xb0] sm:$0xff]
        %v2349 = vld [vmem:[#allocation13 + $0xb8] sm:$0xff]
        %v2350 = vld [vmem:[#allocation13 + $0xc0] sm:$0xff]
        %v2351 = vld [vmem:[#allocation13 + $0xc8] sm:$0xff]
        %v2352 = vld [vmem:[#allocation13 + $0xd0] sm:$0xff]
        %v2353 = vld [vmem:[#allocation13 + $0xd8] sm:$0xff]
        %v2354 = vld [vmem:[#allocation13 + $0xe0] sm:$0xff]
        %v2355 = vld [vmem:[#allocation13 + $0xe8] sm:$0xff]
        %v2356 = vld [vmem:[#allocation13 + $0xf0] sm:$0xff]
        %v2357 = vld [vmem:[#allocation13 + $0xf8] sm:$0xff]
        %v2358 = vld [vmem:[#allocation13 + $0x100] sm:$0xff]
        %v2359 = vld [vmem:[#allocation13 + $0x108] sm:$0xff]
        %v2360 = vld [vmem:[#allocation13 + $0x110] sm:$0xff]
        %v2361 = vld [vmem:[#allocation13 + $0x118] sm:$0xff]
        %v2362 = vld [vmem:[#allocation13 + $0x120] sm:$0xff]
        %v2363 = vld [vmem:[#allocation13 + $0x128] sm:$0xff]
        %v2364 = vld [vmem:[#allocation13 + $0x130] sm:$0xff]
        %v2365 = vld [vmem:[#allocation13 + $0x138] sm:$0xff]
        %v2366 = vld [vmem:[#allocation13 + $0x140] sm:$0xff]
        %v2367 = vld [vmem:[#allocation13 + $0x148] sm:$0xff]
        %v2368 = vld [vmem:[#allocation13 + $0x150] sm:$0xff]
        %v2369 = vld [vmem:[#allocation13 + $0x158] sm:$0xff]
        %v2370 = vld [vmem:[#allocation13 + $0x160] sm:$0xff]
        %v2371 = vld [vmem:[#allocation13 + $0x168] sm:$0xff]
        %v2372 = vld [vmem:[#allocation13 + $0x170] sm:$0xff]
        %v2373 = vld [vmem:[#allocation13 + $0x178] sm:$0xff]
        %v2374 = vld [vmem:[#allocation13 + $0x180] sm:$0xff]
        %v2375 = vld [vmem:[#allocation13 + $0x188] sm:$0xff]
        %v2376 = vld [vmem:[#allocation13 + $0x190] sm:$0xff]
        %v2377 = vld [vmem:[#allocation13 + $0x198] sm:$0xff]
        %v2378 = vld [vmem:[#allocation13 + $0x1a0] sm:$0xff]
        %v2379 = vld [vmem:[#allocation13 + $0x1a8] sm:$0xff]
        %v2380 = vld [vmem:[#allocation13 + $0x1b0] sm:$0xff]
        %v2381 = vld [vmem:[#allocation13 + $0x1b8] sm:$0xff]
        %v2382 = vld [vmem:[#allocation13 + $0x1c0] sm:$0xff]
        %v2383 = vld [vmem:[#allocation13 + $0x1c8] sm:$0xff]
        %v2384 = vld [vmem:[#allocation13 + $0x1d0] sm:$0xff]
        %v2385 = vld [vmem:[#allocation13 + $0x1d8] sm:$0xff]
        %v2386 = vld [vmem:[#allocation13 + $0x1e0] sm:$0xff]
        %v2387 = vld [vmem:[#allocation13 + $0x1e8] sm:$0xff]
        %v2388 = vld [vmem:[#allocation13 + $0x1f0] sm:$0xff]
        %v2389 = vld [vmem:[#allocation13 + $0x1f8] sm:$0xff]
        %v2390 = vld [vmem:[%s12] sm:$0x1]
        %v2392 = vlaneseq
        %v2393 = vshrl.u32 %v2392, 7
        %v2394 = vsub.s32 0, %v2393
        %v2395 = vrot.slane %v2390, %v2394
        %2397 = vmatprep.subr.mxu0 0.0
        %2398 = vmatpush1.msra.mxu0 %v2326
        %2399 = vmatprep.subr.mxu0 0.0
        %2400 = vmatpush1.msra.mxu0 %v2327
        %2401 = vmatprep.subr.mxu0 0.0
        %2402 = vmatpush1.msra.mxu0 %v2328
        %2403 = vmatprep.subr.mxu0 0.0
        %2404 = vmatpush1.msra.mxu0 %v2329
        %2405 = vmatprep.subr.mxu0 0.0
        %2406 = vmatpush1.msra.mxu0 %v2330
        %2407 = vmatprep.subr.mxu0 0.0
        %2408 = vmatpush1.msra.mxu0 %v2331
        %2409 = vmatprep.subr.mxu0 0.0
        %2410 = vmatpush1.msra.mxu0 %v2332
        %2411 = vmatprep.subr.mxu0 0.0
        %2412 = vmatpush1.msra.mxu0 %v2333
        %2413 = vmatprep.subr.mxu0 0.0
        %2414 = vmatpush1.msra.mxu0 %v2334
        %2415 = vmatprep.subr.mxu0 0.0
        %2416 = vmatpush1.msra.mxu0 %v2335
        %2417 = vmatprep.subr.mxu0 0.0
        %2418 = vmatpush1.msra.mxu0 %v2336
        %2419 = vmatprep.subr.mxu0 0.0
        %2420 = vmatpush1.msra.mxu0 %v2337
        %2421 = vmatprep.subr.mxu0 0.0
        %2422 = vmatpush1.msra.mxu0 %v2338
        %2423 = vmatprep.subr.mxu0 0.0
        %2424 = vmatpush1.msra.mxu0 %v2339
        %2425 = vmatprep.subr.mxu0 0.0
        %2426 = vmatpush1.msra.mxu0 %v2340
        %2427 = vmatprep.subr.mxu0 0.0
        %2428 = vmatpush1.msra.mxu0 %v2341
        %2429 = vmatprep.subr.mxu0 0.0
        %2430 = vmatpush1.msra.mxu0 %v2342
        %2431 = vmatprep.subr.mxu0 0.0
        %2432 = vmatpush1.msra.mxu0 %v2343
        %2433 = vmatprep.subr.mxu0 0.0
        %2434 = vmatpush1.msra.mxu0 %v2344
        %2435 = vmatprep.subr.mxu0 0.0
        %2436 = vmatpush1.msra.mxu0 %v2345
        %2437 = vmatprep.subr.mxu0 0.0
        %2438 = vmatpush1.msra.mxu0 %v2346
        %2439 = vmatprep.subr.mxu0 0.0
        %2440 = vmatpush1.msra.mxu0 %v2347
        %2441 = vmatprep.subr.mxu0 0.0
        %2442 = vmatpush1.msra.mxu0 %v2348
        %2443 = vmatprep.subr.mxu0 0.0
        %2444 = vmatpush1.msra.mxu0 %v2349
        %2445 = vmatprep.subr.mxu0 0.0
        %2446 = vmatpush1.msra.mxu0 %v2350
        %2447 = vmatprep.subr.mxu0 0.0
        %2448 = vmatpush1.msra.mxu0 %v2351
        %2449 = vmatprep.subr.mxu0 0.0
        %2450 = vmatpush1.msra.mxu0 %v2352
        %2451 = vmatprep.subr.mxu0 0.0
        %2452 = vmatpush1.msra.mxu0 %v2353
        %2453 = vmatprep.subr.mxu0 0.0
        %2454 = vmatpush1.msra.mxu0 %v2354
        %2455 = vmatprep.subr.mxu0 0.0
        %2456 = vmatpush1.msra.mxu0 %v2355
        %2457 = vmatprep.subr.mxu0 0.0
        %2458 = vmatpush1.msra.mxu0 %v2356
        %2459 = vmatprep.subr.mxu0 0.0
        %2460 = vmatpush1.msra.mxu0 %v2357
        %2461 = vmatprep.mubr.f32.mxu0 %v2319
        %2462 = vmatmul.mubr.f32.gmra.mrb[0].mxu0 %v2318
        %v2463 = vpop.f32.mrb[0].mxu0
        %v2464 = vadd.f32 %v2395, %v2463
        %v2465 = vpop.f32.mrb[0].mxu0
        %2466 = vmatprep.mubr.f32.mxu0 %v2323
        %2467 = vmatmul.mubr.f32.gmra.mrb[0].mxu0 %v2322
        %v2468 = vpop.f32.mrb[0].mxu0
        %v2469 = vadd.f32 %v2395, %v2468
        %v2470 = vpop.f32.mrb[0].mxu0
        %2471 = vdwg.mxu0
        %2472 = vmatprep.subr.mxu0 0.0
        %2473 = vmatpush1.msra.mxu0 %v2358
        %2474 = vmatprep.subr.mxu0 0.0
        %2475 = vmatpush1.msra.mxu0 %v2359
        %2476 = vmatprep.subr.mxu0 0.0
        %2477 = vmatpush1.msra.mxu0 %v2360
        %2478 = vmatprep.subr.mxu0 0.0
        %2479 = vmatpush1.msra.mxu0 %v2361
        %2480 = vmatprep.subr.mxu0 0.0
        %2481 = vmatpush1.msra.mxu0 %v2362
        %2482 = vmatprep.subr.mxu0 0.0
        %2483 = vmatpush1.msra.mxu0 %v2363
        %2484 = vmatprep.subr.mxu0 0.0
        %2485 = vmatpush1.msra.mxu0 %v2364
        %2486 = vmatprep.subr.mxu0 0.0
        %2487 = vmatpush1.msra.mxu0 %v2365
        %2488 = vmatprep.subr.mxu0 0.0
        %2489 = vmatpush1.msra.mxu0 %v2366
        %2490 = vmatprep.subr.mxu0 0.0
        %2491 = vmatpush1.msra.mxu0 %v2367
        %2492 = vmatprep.subr.mxu0 0.0
        %2493 = vmatpush1.msra.mxu0 %v2368
        %2494 = vmatprep.subr.mxu0 0.0
        %2495 = vmatpush1.msra.mxu0 %v2369
        %2496 = vmatprep.subr.mxu0 0.0
        %2497 = vmatpush1.msra.mxu0 %v2370
        %2498 = vmatprep.subr.mxu0 0.0
        %2499 = vmatpush1.msra.mxu0 %v2371
        %2500 = vmatprep.subr.mxu0 0.0
        %2501 = vmatpush1.msra.mxu0 %v2372
        %2502 = vmatprep.subr.mxu0 0.0
        %2503 = vmatpush1.msra.mxu0 %v2373
        %2504 = vmatprep.subr.mxu0 0.0
        %2505 = vmatpush1.msra.mxu0 %v2374
        %2506 = vmatprep.subr.mxu0 0.0
        %2507 = vmatpush1.msra.mxu0 %v2375
        %2508 = vmatprep.subr.mxu0 0.0
        %2509 = vmatpush1.msra.mxu0 %v2376
        %2510 = vmatprep.subr.mxu0 0.0
        %2511 = vmatpush1.msra.mxu0 %v2377
        %2512 = vmatprep.subr.mxu0 0.0
        %2513 = vmatpush1.msra.mxu0 %v2378
        %2514 = vmatprep.subr.mxu0 0.0
        %2515 = vmatpush1.msra.mxu0 %v2379
        %2516 = vmatprep.subr.mxu0 0.0
        %2517 = vmatpush1.msra.mxu0 %v2380
        %2518 = vmatprep.subr.mxu0 0.0
        %2519 = vmatpush1.msra.mxu0 %v2381
        %2520 = vmatprep.subr.mxu0 0.0
        %2521 = vmatpush1.msra.mxu0 %v2382
        %2522 = vmatprep.subr.mxu0 0.0
        %2523 = vmatpush1.msra.mxu0 %v2383
        %2524 = vmatprep.subr.mxu0 0.0
        %2525 = vmatpush1.msra.mxu0 %v2384
        %2526 = vmatprep.subr.mxu0 0.0
        %2527 = vmatpush1.msra.mxu0 %v2385
        %2528 = vmatprep.subr.mxu0 0.0
        %2529 = vmatpush1.msra.mxu0 %v2386
        %2530 = vmatprep.subr.mxu0 0.0
        %2531 = vmatpush1.msra.mxu0 %v2387
        %2532 = vmatprep.subr.mxu0 0.0
        %2533 = vmatpush1.msra.mxu0 %v2388
        %2534 = vmatprep.subr.mxu0 0.0
        %2535 = vmatpush1.msra.mxu0 %v2389
        %2536 = vmatprep.mubr.f32.mxu0 %v2321
        %2537 = vmatmul.mubr.f32.gmra.mrb[0].mxu0 %v2320
        %v2538 = vpop.f32.mrb[0].mxu0
        %v2539 = vadd.f32 %v2464, %v2538
        %v2540 = vpop.f32.mrb[0].mxu0
        %2541 = vmatprep.mubr.f32.mxu0 %v2325
        %2542 = vmatmul.mubr.f32.gmra.mrb[0].mxu0 %v2324
        %v2543 = vpop.f32.mrb[0].mxu0
        %v2544 = vadd.f32 %v2469, %v2543
        %v2545 = vpop.f32.mrb[0].mxu0
        %2546 = vdwg.mxu0
        %v2547 = vadd.f32 %v1972, %v2539
        %v2548 = vadd.f32 %v1973, %v2544
        %2549 = vst [vmem:[%s541] sm:$0xff] %v2547
        %2550 = vst [vmem:[%s541 + $0x8] sm:$0xff] %v2548
        %s2551 = sand.u32 %s319, 1
        %s2552 = scalar_lea.sflag [#allocation4], %s2551
        %s2553 = sand.u32 %s319, 1
        %s2554 = smul.addr %s2553, 16
        %s2555 = scalar_lea.vmem [#allocation14], %s2554
        // Predicated region
        $region101: #{tpu_custom_call.1} parent=71 // pred_check
          %p2556 = pneg %p329
        $region102: #{tpu_custom_call.1} parent=71 // pred_check_branch
          %2558 = sbr.rel (%p2556) target = $region104
        $region103: #{tpu_custom_call.1} parent=71 // pred_region
          %s2560 = ssub.s32 256, 256
          %2561 = vsyncadd %s2552, %s2560
          %s2562 = smul.addr %s33, 2
          %s2563 = smul.addr %s2562, 128
          %s2564 = scalar_lea.hbm %s13, %s2563
          %s2565 = sshll.u32 %s2555, 4
          %s2566 = int_to_ptr.vmem [resolvable:$true] %s2565
          %2571 = dma.vmem_to_hbm [thread:$0]  %s2566, 256, %s2564, %s2552, 128, 128, 8
        $region104: #{tpu_custom_call.1} parent=71 // pred_fallthru
          _
      $region72: #{tpu_custom_call.1} parent=5 // pred_fallthru
        _
      %p2572 = scmp.le.s32.totalorder 2, %s28
      // Predicated region
      $region105: #{tpu_custom_call.1} parent=5 // pred_check
        %p2573 = pneg %p2572
      $region106: #{tpu_custom_call.1} parent=5 // pred_check_branch
        %2575 = sbr.rel (%p2573) target = $region108
      $region107: #{tpu_custom_call.1} parent=5 // pred_region
        %s2576 = ssub.s32 %s28, 2
        // Predicated region
        $region109: #{tpu_custom_call.1} parent=107 // pred_check
          %p2577 = pneg %p335
        $region110: #{tpu_custom_call.1} parent=107 // pred_check_branch
          %2579 = sbr.rel (%p2577) target = $region112
        $region111: #{tpu_custom_call.1} parent=107 // pred_region
          %s2580 = sand.u32 %s320, 1
          %s2581 = scalar_lea.sflag [#allocation4], %s2580
          %s2582 = sand.u32 %s320, 1
          %s2583 = smul.addr %s2582, 16
          %s2584 = scalar_lea.vmem [#allocation14], %s2583
          %2585 = dma.done %s2581, 256
        $region112: #{tpu_custom_call.1} parent=107 // pred_fallthru
          _
      $region108: #{tpu_custom_call.1} parent=5 // pred_fallthru
        _
    $region6: #{tpu_custom_call.1} parent=1 // loop_footer
      %s32 = sadd.s32 1, %s28
    $region7: #{tpu_custom_call.1} parent=1 // loop_footer_branch
      %27 = sbr.rel target = $region3
    $region8: #{tpu_custom_call.1} parent=1 // loop_exit
      _
    %2586 = vsyncpa [#allocation3], 1
    %s2587 = scalar_lea.sflag [#allocation3], 1
    %2588 = vsyncpa %s2587, 1
    %2589 = vsyncpa [#allocation6], 1
    %2590 = vsyncpa [#allocation9], 1
    %2591 = vsyncpa [#allocation12], 1
    %2592 = vsyncpa [#allocation4], 1
    %s2593 = scalar_lea.sflag [#allocation4], 1
    %2594 = vsyncpa %s2593, 1

</llo_original>
